<compile_context>
chip_gen: v7x
topology: tpu7x:2x2x1
jax: 0.10.0
libtpu: 0.0.40
codegen_flags: <defaults>
</compile_context>

<pallas_src>
import functools
import math

import jax
import jax.numpy as jnp
from jax.experimental import pallas as pl
from jax.experimental.pallas import tpu as pltpu

# ----------------------------- configuration -------------------------------
BATCH = 2
HIDDEN = 32                 # transformer.d_model (multiple of 32 for GroupNorm(32, .))
NUM_CLASSES = 16
NUM_QUERIES = 8
NUM_FEATURE_LEVELS = 3
NUM_DECODER_LAYERS = 2
BACKBONE_CHANNELS = [8, 16]             # backbone.num_channels
BACKBONE_SIZES = [(16, 16), (8, 8)]     # spatial sizes of backbone feature maps
IMG_HW = (32, 32)                       # samples.mask spatial size
GN_EPS = 1e-5
INV_SIG_EPS = 1e-5


# ---------------------------- Pallas kernels --------------------------------
def proj_gn_kernel(hw_ref, x_ref, w_ref, b_ref, g_ref, be_ref, o_ref,
                   *, batch, hw_max, cg, eps):
    """Transposed conv-as-matmul (y^T = W^T x^T) + per-sample GroupNorm, one level.

    x_ref:  (1, Cin_max, B*HW_max) bf16, zero-padded per level/sample.
    w_ref:  (1, H, Cin_max)        bf16, zero-padded along Cin.
    hw_ref: SMEM (num_levels,) int32, valid spatial size (HW) per level.
    """
    hw_l = hw_ref[pl.program_id(0)]                      # valid HW of this level
    x = x_ref[0]                                         # (Cin_max, B*HW_max)
    w = w_ref[0]                                         # (H, Cin_max)
    y = jnp.dot(w, x, preferred_element_type=jnp.float32) + b_ref[0]   # (H, B*HW_max) f32
    h_dim = y.shape[0]
    lanes = jax.lax.broadcasted_iota(jnp.int32, y.shape, 1)
    cnt = (hw_l * cg).astype(jnp.float32)                # elements per GroupNorm group

    def group_agg(t):                                    # (H, 1) -> per-group sums, broadcast back
        if cg == 1:                                      # GroupNorm(32, H) with H == 32
            return t
        g = t.reshape(h_dim // cg, cg).sum(axis=1, keepdims=True)
        return jnp.broadcast_to(g, (h_dim // cg, cg)).reshape(h_dim, 1)

    out = jnp.zeros_like(y)
    for s in range(batch):                               # static unroll: per-sample statistics
        valid = (lanes >= s * hw_max) & (lanes < s * hw_max + hw_l)
        mean = group_agg(jnp.sum(jnp.where(valid, y, 0.0), axis=1, keepdims=True)) / cnt
        d = jnp.where(valid, y - mean, 0.0)              # two-pass variance (stable)
        var = group_agg(jnp.sum(d * d, axis=1, keepdims=True)) / cnt
        inv_std = jax.lax.rsqrt(jnp.maximum(var, 0.0) + eps)
        out = jnp.where(valid, (y - mean) * inv_std, out)
    o_ref[0] = (out * g_ref[0] + be_ref[0]).astype(o_ref.dtype)


def head_kernel(hs_ref, ref_ref, wa_ref, ba_ref, w2_ref, b2_ref, w3_ref, b3_ref,
                o_ref, *, nc):
    """class_embed + bbox_embed MLP + inverse_sigmoid(ref) add + sigmoid.

    Processes all (layer, batch, query) rows in one shot; output is a lane-dense
    (rows, 128) slab: [:, :nc] = logits, [:, nc:nc+4] = box coords, rest = padding.
    """
    hs = hs_ref[...]                                     # (R, H) bf16
    r = jnp.clip(ref_ref[...], 0.0, 1.0)                 # (R, 2) f32
    # inverse_sigmoid (eps = 1e-5, matching util.misc.inverse_sigmoid)
    inv = jnp.log(jnp.maximum(r, INV_SIG_EPS)) - jnp.log(jnp.maximum(1.0 - r, INV_SIG_EPS))

    # fused [class_embed | bbox_embed layer 0] -> one (H, NC+H) matmul on the shared hs LHS
    ya = jnp.dot(hs, wa_ref[...], preferred_element_type=jnp.float32) + ba_ref[...]
    logits = ya[:, :nc]
    h1 = jnp.maximum(ya[:, nc:], 0.0)
    h2 = jnp.maximum(
        jnp.dot(h1.astype(jnp.bfloat16), w2_ref[...],
                preferred_element_type=jnp.float32) + b2_ref[...], 0.0)
    tmp = jnp.dot(h2.astype(jnp.bfloat16), w3_ref[...],
                  preferred_element_type=jnp.float32) + b3_ref[...]      # (R, 4)
    # tmp[..., :2] += inverse_sigmoid(reference)  (VPU pad instead of a K=2 matmul)
    tmp = tmp + jnp.concatenate([inv, jnp.zeros_like(inv)], axis=-1)
    coord = jax.nn.sigmoid(tmp)

    pad = jnp.zeros((hs.shape[0], o_ref.shape[1] - nc - 4), jnp.float32)
    o_ref[...] = jnp.concatenate([logits, coord, pad], axis=-1).astype(o_ref.dtype)


# --------------------------- pallas_call wrappers ---------------------------
def proj_gn_call(hw_arr, x_packed, w_t, b, gamma, beta, *, batch, hw_max):
    """All input_proj levels in one call. Returns (L, H, B*HW_max) transposed features."""
    L, c_max, bhw = x_packed.shape
    H = w_t.shape[1]
    kernel = functools.partial(proj_gn_kernel, batch=batch, hw_max=hw_max,
                               cg=H // 32, eps=GN_EPS)
    return pl.pallas_call(
        kernel,
        out_shape=jax.ShapeDtypeStruct((L, H, bhw), jnp.float32),
        grid_spec=pltpu.PrefetchScalarGridSpec(
            num_scalar_prefetch=1,
            grid=(L,),
            in_specs=[
                pl.BlockSpec((1, c_max, bhw), lambda l, hw: (l, 0, 0)),
                pl.BlockSpec((1, H, c_max), lambda l, hw: (l, 0, 0)),
                pl.BlockSpec((1, H, 1), lambda l, hw: (l, 0, 0)),
                pl.BlockSpec((1, H, 1), lambda l, hw: (l, 0, 0)),
                pl.BlockSpec((1, H, 1), lambda l, hw: (l, 0, 0)),
            ],
            out_specs=pl.BlockSpec((1, H, bhw), lambda l, hw: (l, 0, 0)),
        ),
        compiler_params=pltpu.CompilerParams(dimension_semantics=("parallel",)),
    )(hw_arr, x_packed, w_t, b, gamma, beta)


def head_call(hs, refs, cw, cb, w1, b1, w2, b2, w3, b3):
    """hs: (L,B,Q,H), refs: (L,B,Q,2) -> logits (L,B,Q,NC), coords (L,B,Q,4)."""
    L, B, Q, H = hs.shape
    NC = cw.shape[1]
    R = L * B * Q
    width = ((NC + 4 + 127) // 128) * 128               # lane-dense packed output width
    wa = jnp.concatenate([cw, w1], axis=1).astype(jnp.bfloat16)   # (H, NC+H)
    ba = jnp.concatenate([cb, b1], axis=1)                        # (1, NC+H)
    slab = pl.pallas_call(
        functools.partial(head_kernel, nc=NC),
        out_shape=jax.ShapeDtypeStruct((R, width), jnp.float32),
    )(hs.reshape(R, H).astype(jnp.bfloat16), refs.reshape(R, 2),
      wa, ba, w2.astype(jnp.bfloat16), b2, w3.astype(jnp.bfloat16), b3)
    slab = slab.reshape(L, B, Q, width)
    return slab[..., :NC], slab[..., NC:NC + 4]


# ------------------------------- JAX glue -----------------------------------
def _pack_level(x, c_max, hw_max):
    """(B, HW, Cin) -> (Cin_max, B*HW_max): channels-first transpose + zero padding."""
    B, hw, c = x.shape
    xt = jnp.transpose(x, (2, 0, 1))                               # (Cin, B, HW)
    xt = jnp.pad(xt, ((0, c_max - c), (0, 0), (0, hw_max - hw)))
    return xt.reshape(c_max, B * hw_max)


def im2col_3x3_s2(x):
    """3x3, stride 2, pad 1 patch extraction. x: (B, H, W, C) -> (B, Ho, Wo, 9*C)."""
    # TODO(synk): at real DETR resolutions this should be a 9-tap in-kernel accumulation
    # instead of materializing the 9x im2col buffer in HBM; negligible at 8x8 here.
    B, Hh, Ww, C = x.shape
    xp = jnp.pad(x, ((0, 0), (1, 1), (1, 1), (0, 0)))
    Ho, Wo = (Hh + 1) // 2, (Ww + 1) // 2
    patches = []
    for dy in range(3):
        for dx in range(3):
            patches.append(xp[:, dy:dy + 2 * Ho:2, dx:dx + 2 * Wo:2, :])
    return jnp.concatenate(patches, axis=-1)


def nearest_downsample_mask(mask, out_hw):
    """Emulates F.interpolate(mode='nearest') on a boolean mask (B, H, W)."""
    B, Hs, Ws = mask.shape
    Ho, Wo = out_hw
    ri = (jnp.arange(Ho) * Hs // Ho).astype(jnp.int32)
    ci = (jnp.arange(Wo) * Ws // Wo).astype(jnp.int32)
    return mask[:, ri][:, :, ci]


def transformer_stub(srcs, masks, poss, query_embed, w_ref, num_layers):
    # TODO(synk): the deformable transformer is an external module; stubbed with
    # a deterministic pooling + query mixing so the head kernel has real inputs.
    B = srcs[0].shape[0]
    hidden = srcs[0].shape[-1]
    flat = jnp.concatenate(
        [s.reshape(B, -1, hidden) + p.reshape(B, -1, hidden)
         for s, p in zip(srcs, poss)], axis=1)
    pooled = flat.mean(axis=1)                              # (B, hidden)
    q_pos, tgt = jnp.split(query_embed, 2, axis=1)          # (Q, hidden) each
    Q = query_embed.shape[0]
    cur = jnp.broadcast_to(tgt[None], (B, Q, hidden)) + pooled[:, None, :]
    hs_list = []
    for l in range(num_layers):
        cur = jnp.tanh(cur + 0.1 * (l + 1) * q_pos[None])
        hs_list.append(cur)
    hs = jnp.stack(hs_list)                                 # (L, B, Q, hidden)
    init_reference = jax.nn.sigmoid(q_pos @ w_ref)          # (Q, 2)
    init_reference = jnp.broadcast_to(init_reference[None], (B, Q, 2))
    inter_references = jax.nn.sigmoid(jnp.einsum('lbqh,hr->lbqr', hs, w_ref))
    return hs, init_reference, inter_references, None, None


def make_params(key):
    ks = jax.random.split(key, 8)
    H, NC, Q = HIDDEN, NUM_CLASSES, NUM_QUERIES
    bias_value = -math.log((1 - 0.01) / 0.01)

    def xavier(k, fan_in, fan_out, shape):
        bound = math.sqrt(6.0 / (fan_in + fan_out))
        return jax.random.uniform(k, shape, jnp.float32, -bound, bound)

    input_proj = []
    # backbone levels: 1x1 conv + GroupNorm
    for i, c in enumerate(BACKBONE_CHANNELS):
        input_proj.append(dict(
            w=xavier(ks[i], c, H, (c, H)),
            b=jnp.zeros((H,), jnp.float32),
            gamma=jnp.ones((H,), jnp.float32),
            beta=jnp.zeros((H,), jnp.float32)))
    # extra level: 3x3 stride-2 conv + GroupNorm (im2col'd weight: (9*Cin, H))
    c_last = BACKBONE_CHANNELS[-1]
    input_proj.append(dict(
        w=xavier(ks[2], 9 * c_last, 9 * H, (9 * c_last, H)),
        b=jnp.zeros((H,), jnp.float32),
        gamma=jnp.ones((H,), jnp.float32),
        beta=jnp.zeros((H,), jnp.float32)))

    params = dict(
        input_proj=input_proj,
        query_embed=0.02 * jax.random.normal(ks[3], (Q, 2 * H), jnp.float32),
        class_w=0.02 * jax.random.normal(ks[4], (H, NC), jnp.float32),
        class_b=jnp.full((1, NC), bias_value, jnp.float32),
        bbox_w1=0.02 * jax.random.normal(ks[5], (H, H), jnp.float32),
        bbox_b1=jnp.zeros((1, H), jnp.float32),
        bbox_w2=0.02 * jax.random.normal(ks[6], (H, H), jnp.float32),
        bbox_b2=jnp.zeros((1, H), jnp.float32),
        bbox_w3=jnp.zeros((H, 4), jnp.float32),              # constant_(weight, 0)
        bbox_b3=jnp.array([[0.0, 0.0, -2.0, -2.0]], jnp.float32),  # bias[2:] = -2
        w_ref=0.1 * jax.random.normal(ks[7], (H, 2), jnp.float32),  # transformer stub
    )
    return params


def deformable_detr_forward(params, features, masks, pos, samples_mask, extra_pos):
    B = features[0].shape[0]
    level_x, spatial = [], []
    for t in features:
        _, Hh, Ww, C = t.shape
        level_x.append(t.reshape(B, Hh * Ww, C))
        spatial.append((Hh, Ww))
    out_masks = list(masks)
    poss = list(pos)

    if NUM_FEATURE_LEVELS > len(features):
        # TODO(synk): only one extra pyramid level is handled (matches this config);
        # further extra levels would consume srcs[-1] and need a second projection pass.
        patches = im2col_3x3_s2(features[-1])                # (B, Ho, Wo, 9*C)
        _, Ho, Wo, Ck = patches.shape
        level_x.append(patches.reshape(B, Ho * Wo, Ck))
        spatial.append((Ho, Wo))
        out_masks.append(nearest_downsample_mask(samples_mask, (Ho, Wo)))
        poss.append(extra_pos)

    # ---- single merged input-proj + GroupNorm pallas_call over all levels ----
    hws = [h * w for h, w in spatial]
    cins = [x.shape[-1] for x in level_x]
    hw_max, c_max = max(hws), max(cins)
    x_packed = jnp.stack([_pack_level(x, c_max, hw_max) for x in level_x])   # (L, Cmax, B*HWmax)
    w_t = jnp.stack([jnp.pad(p['w'].T, ((0, 0), (0, c_max - p['w'].shape[0])))
                     for p in params['input_proj']])                          # (L, H, Cmax)
    b_s = jnp.stack([p['b'][:, None] for p in params['input_proj']])          # (L, H, 1)
    g_s = jnp.stack([p['gamma'][:, None] for p in params['input_proj']])
    be_s = jnp.stack([p['beta'][:, None] for p in params['input_proj']])
    hw_arr = jnp.asarray(hws, jnp.int32)

    y_all = proj_gn_call(hw_arr, x_packed.astype(jnp.bfloat16),
                         w_t.astype(jnp.bfloat16), b_s, g_s, be_s,
                         batch=B, hw_max=hw_max)                              # (L, H, B*HWmax)

    srcs = []
    for l, (Hh, Ww) in enumerate(spatial):
        y = y_all[l].reshape(HIDDEN, B, hw_max)[:, :, :Hh * Ww]               # (H, B, HW)
        srcs.append(jnp.transpose(y, (1, 2, 0)).reshape(B, Hh, Ww, HIDDEN))

    hs, init_reference, inter_references, _, _ = transformer_stub(
        srcs, out_masks, poss, params['query_embed'], params['w_ref'], NUM_DECODER_LAYERS)

    # reference for lvl 0 is init_reference, lvl > 0 is inter_references[lvl-1]
    refs = jnp.concatenate([init_reference[None], inter_references[:-1]], axis=0)

    logits, coords = head_call(
        hs, refs, params['class_w'], params['class_b'],
        params['bbox_w1'], params['bbox_b1'],
        params['bbox_w2'], params['bbox_b2'],
        params['bbox_w3'], params['bbox_b3'])

    out = {'pred_logits': logits[-1], 'pred_boxes': coords[-1]}
    # aux_loss=True
    out['aux_outputs'] = [{'pred_logits': logits[i], 'pred_boxes': coords[i]}
                          for i in range(logits.shape[0] - 1)]
    return out


if __name__ == "__main__":
    key = jax.random.PRNGKey(0)
    k_param, k_f0, k_f1, k_p0, k_p1, k_p2 = jax.random.split(key, 6)
    params = make_params(k_param)

    # synthetic backbone outputs (backbone is an external module -> stubbed)
    features = [
        jax.random.normal(k_f0, (BATCH,) + BACKBONE_SIZES[0] + (BACKBONE_CHANNELS[0],), jnp.float32),
        jax.random.normal(k_f1, (BATCH,) + BACKBONE_SIZES[1] + (BACKBONE_CHANNELS[1],), jnp.float32),
    ]
    masks = [jnp.zeros((BATCH,) + s, jnp.bool_) for s in BACKBONE_SIZES]
    pos = [
        0.1 * jax.random.normal(k_p0, (BATCH,) + BACKBONE_SIZES[0] + (HIDDEN,), jnp.float32),
        0.1 * jax.random.normal(k_p1, (BATCH,) + BACKBONE_SIZES[1] + (HIDDEN,), jnp.float32),
    ]
    extra_size = ((BACKBONE_SIZES[1][0] + 1) // 2, (BACKBONE_SIZES[1][1] + 1) // 2)
    extra_pos = 0.1 * jax.random.normal(k_p2, (BATCH,) + extra_size + (HIDDEN,), jnp.float32)
    samples_mask = jnp.zeros((BATCH,) + IMG_HW, jnp.bool_)

    fwd = jax.jit(deformable_detr_forward)
    out = fwd(params, features, masks, pos, samples_mask, extra_pos)
    jax.block_until_ready(out['pred_logits'])
    jax.block_until_ready(out['pred_boxes'])

    assert out['pred_logits'].shape == (BATCH, NUM_QUERIES, NUM_CLASSES)
    assert out['pred_boxes'].shape == (BATCH, NUM_QUERIES, 4)
    assert len(out['aux_outputs']) == NUM_DECODER_LAYERS - 1
    assert bool(jnp.all((out['pred_boxes'] >= 0) & (out['pred_boxes'] <= 1)))
    print("KERNEL_OK")
</pallas_src>

<mosaic_0001>
module attributes {stable_mosaic.version = 11 : i64} {
  func.func @proj_gn_kernel(%arg0: i32, %arg1: memref<3xi32, #tpu.memory_space<smem>>, %arg2: memref<1x144x512xbf16, #tpu.memory_space<vmem>>, %arg3: memref<1x32x144xbf16, #tpu.memory_space<vmem>>, %arg4: memref<1x32x1xf32, #tpu.memory_space<vmem>>, %arg5: memref<1x32x1xf32, #tpu.memory_space<vmem>>, %arg6: memref<1x32x1xf32, #tpu.memory_space<vmem>>, %arg7: memref<1x32x512xf32, #tpu.memory_space<vmem>>) attributes {dimension_semantics = [#tpu.dimension_semantics<parallel>], iteration_bounds = array<i64: 3>, scalar_prefetch = 1 : i64, scratch_operands = 0 : i64, tpu.core_type = #tpu.core_type<tc>, window_params = [{transform_indices = @transform_0, window_bounds = array<i64: 1, 144, 512>}, {transform_indices = @transform_1, window_bounds = array<i64: 1, 32, 144>}, {transform_indices = @transform_2, window_bounds = array<i64: 1, 32, 1>}, {transform_indices = @transform_3, window_bounds = array<i64: 1, 32, 1>}, {transform_indices = @transform_4, window_bounds = array<i64: 1, 32, 1>}, {transform_indices = @transform_5, window_bounds = array<i64: 1, 32, 512>}]} {
    %0 = arith.index_cast %arg0 : i32 to index
    %1 = memref.load %arg1[%0] : memref<3xi32, #tpu.memory_space<smem>>
    %c0 = arith.constant 0 : index
    %c0_0 = arith.constant 0 : index
    %c0_1 = arith.constant 0 : index
    %2 = vector.load %arg2[%c0, %c0_0, %c0_1] : memref<1x144x512xbf16, #tpu.memory_space<vmem>>, vector<1x144x512xbf16>
    %3 = vector.shape_cast %2 : vector<1x144x512xbf16> to vector<144x512xbf16>
    %c0_2 = arith.constant 0 : index
    %c0_3 = arith.constant 0 : index
    %c0_4 = arith.constant 0 : index
    %4 = vector.load %arg3[%c0_2, %c0_3, %c0_4] : memref<1x32x144xbf16, #tpu.memory_space<vmem>>, vector<1x32x144xbf16>
    %5 = vector.shape_cast %4 : vector<1x32x144xbf16> to vector<32x144xbf16>
    %cst = arith.constant dense<0.000000e+00> : vector<32x512xf32>
    %6 = tpu.matmul %5, %3, %cst {dimension_numbers = #tpu.dot_dimension_numbers<[1], [0], [0], [1], [0, 0, 1, 1], [], []>} : vector<32x144xbf16>, vector<144x512xbf16>, vector<32x512xf32> -> vector<32x512xf32>
    %c0_5 = arith.constant 0 : index
    %c0_6 = arith.constant 0 : index
    %c0_7 = arith.constant 0 : index
    %7 = vector.load %arg4[%c0_5, %c0_6, %c0_7] : memref<1x32x1xf32, #tpu.memory_space<vmem>>, vector<1x32x1xf32>
    %8 = vector.shape_cast %7 : vector<1x32x1xf32> to vector<32x1xf32>
    %9 = vector.broadcast %8 : vector<32x1xf32> to vector<32x512xf32>
    %10 = arith.addf %6, %9 : vector<32x512xf32>
    %11 = tpu.iota {dimensions = array<i32: 1>} : vector<32x512xi32>
    %c1_i32 = arith.constant 1 : i32
    %12 = arith.muli %1, %c1_i32 : i32
    %13 = arith.sitofp %12 : i32 to f32
    %cst_8 = arith.constant 0.000000e+00 : f32
    %14 = vector.broadcast %cst_8 : f32 to vector<32x512xf32>
    %c0_i32 = arith.constant 0 : i32
    %15 = vector.broadcast %c0_i32 : i32 to vector<32x512xi32>
    %16 = arith.cmpi sge, %11, %15 : vector<32x512xi32>
    %c0_i32_9 = arith.constant 0 : i32
    %17 = arith.addi %c0_i32_9, %1 : i32
    %18 = vector.broadcast %17 : i32 to vector<32x512xi32>
    %19 = arith.cmpi slt, %11, %18 : vector<32x512xi32>
    %20 = arith.andi %16, %19 : vector<32x512xi1>
    %cst_10 = arith.constant 0.000000e+00 : f32
    %21 = vector.broadcast %cst_10 : f32 to vector<32x512xf32>
    %22 = arith.select %20, %10, %21 : vector<32x512xi1>, vector<32x512xf32>
    %cst_11 = arith.constant dense<0.000000e+00> : vector<32xf32>
    %23 = vector.multi_reduction <add>, %22, %cst_11 [1] : vector<32x512xf32> to vector<32xf32>
    %24 = vector.shape_cast %23 : vector<32xf32> to vector<32x1xf32>
    %25 = vector.broadcast %13 : f32 to vector<32x1xf32>
    %26 = arith.divf %24, %25 : vector<32x1xf32>
    %27 = vector.broadcast %26 : vector<32x1xf32> to vector<32x512xf32>
    %28 = arith.subf %10, %27 : vector<32x512xf32>
    %cst_12 = arith.constant 0.000000e+00 : f32
    %29 = vector.broadcast %cst_12 : f32 to vector<32x512xf32>
    %30 = arith.select %20, %28, %29 : vector<32x512xi1>, vector<32x512xf32>
    %31 = arith.mulf %30, %30 : vector<32x512xf32>
    %cst_13 = arith.constant dense<0.000000e+00> : vector<32xf32>
    %32 = vector.multi_reduction <add>, %31, %cst_13 [1] : vector<32x512xf32> to vector<32xf32>
    %33 = vector.shape_cast %32 : vector<32xf32> to vector<32x1xf32>
    %34 = vector.broadcast %13 : f32 to vector<32x1xf32>
    %35 = arith.divf %33, %34 : vector<32x1xf32>
    %cst_14 = arith.constant 0.000000e+00 : f32
    %36 = vector.broadcast %cst_14 : f32 to vector<32x1xf32>
    %37 = arith.maximumf %35, %36 : vector<32x1xf32>
    %cst_15 = arith.constant 9.99999974E-6 : f32
    %38 = vector.broadcast %cst_15 : f32 to vector<32x1xf32>
    %39 = arith.addf %37, %38 : vector<32x1xf32>
    %40 = math.rsqrt %39 : vector<32x1xf32>
    %41 = vector.broadcast %26 : vector<32x1xf32> to vector<32x512xf32>
    %42 = arith.subf %10, %41 : vector<32x512xf32>
    %43 = vector.broadcast %40 : vector<32x1xf32> to vector<32x512xf32>
    %44 = arith.mulf %42, %43 : vector<32x512xf32>
    %45 = arith.select %20, %44, %14 : vector<32x512xi1>, vector<32x512xf32>
    %c256_i32 = arith.constant 256 : i32
    %46 = vector.broadcast %c256_i32 : i32 to vector<32x512xi32>
    %47 = arith.cmpi sge, %11, %46 : vector<32x512xi32>
    %c256_i32_16 = arith.constant 256 : i32
    %48 = arith.addi %c256_i32_16, %1 : i32
    %49 = vector.broadcast %48 : i32 to vector<32x512xi32>
    %50 = arith.cmpi slt, %11, %49 : vector<32x512xi32>
    %51 = arith.andi %47, %50 : vector<32x512xi1>
    %cst_17 = arith.constant 0.000000e+00 : f32
    %52 = vector.broadcast %cst_17 : f32 to vector<32x512xf32>
    %53 = arith.select %51, %10, %52 : vector<32x512xi1>, vector<32x512xf32>
    %cst_18 = arith.constant dense<0.000000e+00> : vector<32xf32>
    %54 = vector.multi_reduction <add>, %53, %cst_18 [1] : vector<32x512xf32> to vector<32xf32>
    %55 = vector.shape_cast %54 : vector<32xf32> to vector<32x1xf32>
    %56 = vector.broadcast %13 : f32 to vector<32x1xf32>
    %57 = arith.divf %55, %56 : vector<32x1xf32>
    %58 = vector.broadcast %57 : vector<32x1xf32> to vector<32x512xf32>
    %59 = arith.subf %10, %58 : vector<32x512xf32>
    %cst_19 = arith.constant 0.000000e+00 : f32
    %60 = vector.broadcast %cst_19 : f32 to vector<32x512xf32>
    %61 = arith.select %51, %59, %60 : vector<32x512xi1>, vector<32x512xf32>
    %62 = arith.mulf %61, %61 : vector<32x512xf32>
    %cst_20 = arith.constant dense<0.000000e+00> : vector<32xf32>
    %63 = vector.multi_reduction <add>, %62, %cst_20 [1] : vector<32x512xf32> to vector<32xf32>
    %64 = vector.shape_cast %63 : vector<32xf32> to vector<32x1xf32>
    %65 = vector.broadcast %13 : f32 to vector<32x1xf32>
    %66 = arith.divf %64, %65 : vector<32x1xf32>
    %cst_21 = arith.constant 0.000000e+00 : f32
    %67 = vector.broadcast %cst_21 : f32 to vector<32x1xf32>
    %68 = arith.maximumf %66, %67 : vector<32x1xf32>
    %cst_22 = arith.constant 9.99999974E-6 : f32
    %69 = vector.broadcast %cst_22 : f32 to vector<32x1xf32>
    %70 = arith.addf %68, %69 : vector<32x1xf32>
    %71 = math.rsqrt %70 : vector<32x1xf32>
    %72 = vector.broadcast %57 : vector<32x1xf32> to vector<32x512xf32>
    %73 = arith.subf %10, %72 : vector<32x512xf32>
    %74 = vector.broadcast %71 : vector<32x1xf32> to vector<32x512xf32>
    %75 = arith.mulf %73, %74 : vector<32x512xf32>
    %76 = arith.select %51, %75, %45 : vector<32x512xi1>, vector<32x512xf32>
    %c0_23 = arith.constant 0 : index
    %c0_24 = arith.constant 0 : index
    %c0_25 = arith.constant 0 : index
    %77 = vector.load %arg5[%c0_23, %c0_24, %c0_25] : memref<1x32x1xf32, #tpu.memory_space<vmem>>, vector<1x32x1xf32>
    %78 = vector.shape_cast %77 : vector<1x32x1xf32> to vector<32x1xf32>
    %79 = vector.broadcast %78 : vector<32x1xf32> to vector<32x512xf32>
    %80 = arith.mulf %76, %79 : vector<32x512xf32>
    %c0_26 = arith.constant 0 : index
    %c0_27 = arith.constant 0 : index
    %c0_28 = arith.constant 0 : index
    %81 = vector.load %arg6[%c0_26, %c0_27, %c0_28] : memref<1x32x1xf32, #tpu.memory_space<vmem>>, vector<1x32x1xf32>
    %82 = vector.shape_cast %81 : vector<1x32x1xf32> to vector<32x1xf32>
    %83 = vector.broadcast %82 : vector<32x1xf32> to vector<32x512xf32>
    %84 = arith.addf %80, %83 : vector<32x512xf32>
    %c0_29 = arith.constant 0 : index
    %c0_30 = arith.constant 0 : index
    %c0_31 = arith.constant 0 : index
    %85 = vector.load %arg7[%c0_29, %c0_30, %c0_31] : memref<1x32x512xf32, #tpu.memory_space<vmem>>, vector<1x32x512xf32>
    %86 = vector.shape_cast %85 : vector<1x32x512xf32> to vector<32x512xf32>
    %87 = vector.shape_cast %84 : vector<32x512xf32> to vector<1x32x512xf32>
    tpu.vector_store %arg7[%c0_29, %c0_30, %c0_31], %87 {strides = array<i32>} : memref<1x32x512xf32, #tpu.memory_space<vmem>>, vector<1x32x512xf32>,
    return
  }
  func.func @transform_0(%arg0: i32, %arg1: memref<3xi32, #tpu.memory_space<smem>>) -> (i32, i32, i32) {
    %c0_i32 = arith.constant 0 : i32
    %c0_i32_0 = arith.constant 0 : i32
    %c0_i32_1 = arith.constant 0 : i32
    return %arg0, %c0_i32, %c0_i32_0 : i32, i32, i32
  }
  func.func @transform_1(%arg0: i32, %arg1: memref<3xi32, #tpu.memory_space<smem>>) -> (i32, i32, i32) {
    %c0_i32 = arith.constant 0 : i32
    %c0_i32_0 = arith.constant 0 : i32
    %c0_i32_1 = arith.constant 0 : i32
    return %arg0, %c0_i32, %c0_i32_0 : i32, i32, i32
  }
  func.func @transform_2(%arg0: i32, %arg1: memref<3xi32, #tpu.memory_space<smem>>) -> (i32, i32, i32) {
    %c0_i32 = arith.constant 0 : i32
    %c0_i32_0 = arith.constant 0 : i32
    %c0_i32_1 = arith.constant 0 : i32
    return %arg0, %c0_i32, %c0_i32_0 : i32, i32, i32
  }
  func.func @transform_3(%arg0: i32, %arg1: memref<3xi32, #tpu.memory_space<smem>>) -> (i32, i32, i32) {
    %c0_i32 = arith.constant 0 : i32
    %c0_i32_0 = arith.constant 0 : i32
    %c0_i32_1 = arith.constant 0 : i32
    return %arg0, %c0_i32, %c0_i32_0 : i32, i32, i32
  }
  func.func @transform_4(%arg0: i32, %arg1: memref<3xi32, #tpu.memory_space<smem>>) -> (i32, i32, i32) {
    %c0_i32 = arith.constant 0 : i32
    %c0_i32_0 = arith.constant 0 : i32
    %c0_i32_1 = arith.constant 0 : i32
    return %arg0, %c0_i32, %c0_i32_0 : i32, i32, i32
  }
  func.func @transform_5(%arg0: i32, %arg1: memref<3xi32, #tpu.memory_space<smem>>) -> (i32, i32, i32) {
    %c0_i32 = arith.constant 0 : i32
    %c0_i32_0 = arith.constant 0 : i32
    %c0_i32_1 = arith.constant 0 : i32
    return %arg0, %c0_i32, %c0_i32_0 : i32, i32, i32
  }
}

module attributes {stable_mosaic.version = 11 : i64} {
  func.func @head_kernel(%arg0: memref<32x32xbf16, #tpu.memory_space<vmem>>, %arg1: memref<32x2xf32, #tpu.memory_space<vmem>>, %arg2: memref<32x48xbf16, #tpu.memory_space<vmem>>, %arg3: memref<1x48xf32, #tpu.memory_space<vmem>>, %arg4: memref<32x32xbf16, #tpu.memory_space<vmem>>, %arg5: memref<1x32xf32, #tpu.memory_space<vmem>>, %arg6: memref<32x4xbf16, #tpu.memory_space<vmem>>, %arg7: memref<1x4xf32, #tpu.memory_space<vmem>>, %arg8: memref<32x128xf32, #tpu.memory_space<vmem>>) attributes {dimension_semantics = [], scalar_prefetch = 0 : i64, scratch_operands = 0 : i64, tpu.core_type = #tpu.core_type<tc>} {
    %c0 = arith.constant 0 : index
    %c0_0 = arith.constant 0 : index
    %0 = vector.load %arg0[%c0, %c0_0] : memref<32x32xbf16, #tpu.memory_space<vmem>>, vector<32x32xbf16>
    %c0_1 = arith.constant 0 : index
    %c0_2 = arith.constant 0 : index
    %1 = vector.load %arg1[%c0_1, %c0_2] : memref<32x2xf32, #tpu.memory_space<vmem>>, vector<32x2xf32>
    %cst = arith.constant 0.000000e+00 : f32
    %cst_3 = arith.constant 1.000000e+00 : f32
    %2 = vector.broadcast %cst : f32 to vector<32x2xf32>
    %3 = arith.maximumf %2, %1 : vector<32x2xf32>
    %4 = vector.broadcast %cst_3 : f32 to vector<32x2xf32>
    %5 = arith.minimumf %4, %3 : vector<32x2xf32>
    %cst_4 = arith.constant 9.99999974E-6 : f32
    %6 = vector.broadcast %cst_4 : f32 to vector<32x2xf32>
    %7 = arith.maximumf %5, %6 : vector<32x2xf32>
    %8 = math.log %7 : vector<32x2xf32>
    %cst_5 = arith.constant 1.000000e+00 : f32
    %9 = vector.broadcast %cst_5 : f32 to vector<32x2xf32>
    %10 = arith.subf %9, %5 : vector<32x2xf32>
    %cst_6 = arith.constant 9.99999974E-6 : f32
    %11 = vector.broadcast %cst_6 : f32 to vector<32x2xf32>
    %12 = arith.maximumf %10, %11 : vector<32x2xf32>
    %13 = math.log %12 : vector<32x2xf32>
    %14 = arith.subf %8, %13 : vector<32x2xf32>
    %c0_7 = arith.constant 0 : index
    %c0_8 = arith.constant 0 : index
    %15 = vector.load %arg2[%c0_7, %c0_8] : memref<32x48xbf16, #tpu.memory_space<vmem>>, vector<32x48xbf16>
    %cst_9 = arith.constant dense<0.000000e+00> : vector<32x48xf32>
    %16 = tpu.matmul %0, %15, %cst_9 {dimension_numbers = #tpu.dot_dimension_numbers<[1], [0], [0], [1], [0, 0, 1, 1], [], []>} : vector<32x32xbf16>, vector<32x48xbf16>, vector<32x48xf32> -> vector<32x48xf32>
    %c0_10 = arith.constant 0 : index
    %c0_11 = arith.constant 0 : index
    %17 = vector.load %arg3[%c0_10, %c0_11] : memref<1x48xf32, #tpu.memory_space<vmem>>, vector<1x48xf32>
    %18 = vector.broadcast %17 : vector<1x48xf32> to vector<32x48xf32>
    %19 = arith.addf %16, %18 : vector<32x48xf32>
    %20 = vector.extract_strided_slice %19 {offsets = [0, 0], sizes = [32, 16], strides = [1, 1]} : vector<32x48xf32> to vector<32x16xf32>
    %21 = vector.extract_strided_slice %19 {offsets = [0, 16], sizes = [32, 32], strides = [1, 1]} : vector<32x48xf32> to vector<32x32xf32>
    %cst_12 = arith.constant 0.000000e+00 : f32
    %22 = vector.broadcast %cst_12 : f32 to vector<32x32xf32>
    %23 = arith.maximumf %21, %22 : vector<32x32xf32>
    %24 = arith.truncf %23 : vector<32x32xf32> to vector<32x32xbf16>
    %c0_13 = arith.constant 0 : index
    %c0_14 = arith.constant 0 : index
    %25 = vector.load %arg4[%c0_13, %c0_14] : memref<32x32xbf16, #tpu.memory_space<vmem>>, vector<32x32xbf16>
    %cst_15 = arith.constant dense<0.000000e+00> : vector<32x32xf32>
    %26 = tpu.matmul %24, %25, %cst_15 {dimension_numbers = #tpu.dot_dimension_numbers<[1], [0], [0], [1], [0, 0, 1, 1], [], []>} : vector<32x32xbf16>, vector<32x32xbf16>, vector<32x32xf32> -> vector<32x32xf32>
    %c0_16 = arith.constant 0 : index
    %c0_17 = arith.constant 0 : index
    %27 = vector.load %arg5[%c0_16, %c0_17] : memref<1x32xf32, #tpu.memory_space<vmem>>, vector<1x32xf32>
    %28 = vector.broadcast %27 : vector<1x32xf32> to vector<32x32xf32>
    %29 = arith.addf %26, %28 : vector<32x32xf32>
    %cst_18 = arith.constant 0.000000e+00 : f32
    %30 = vector.broadcast %cst_18 : f32 to vector<32x32xf32>
    %31 = arith.maximumf %29, %30 : vector<32x32xf32>
    %32 = arith.truncf %31 : vector<32x32xf32> to vector<32x32xbf16>
    %c0_19 = arith.constant 0 : index
    %c0_20 = arith.constant 0 : index
    %33 = vector.load %arg6[%c0_19, %c0_20] : memref<32x4xbf16, #tpu.memory_space<vmem>>, vector<32x4xbf16>
    %cst_21 = arith.constant dense<0.000000e+00> : vector<32x4xf32>
    %34 = tpu.matmul %32, %33, %cst_21 {dimension_numbers = #tpu.dot_dimension_numbers<[1], [0], [0], [1], [0, 0, 1, 1], [], []>} : vector<32x32xbf16>, vector<32x4xbf16>, vector<32x4xf32> -> vector<32x4xf32>
    %c0_22 = arith.constant 0 : index
    %c0_23 = arith.constant 0 : index
    %35 = vector.load %arg7[%c0_22, %c0_23] : memref<1x4xf32, #tpu.memory_space<vmem>>, vector<1x4xf32>
    %36 = vector.broadcast %35 : vector<1x4xf32> to vector<32x4xf32>
    %37 = arith.addf %34, %36 : vector<32x4xf32>
    %cst_24 = arith.constant 0.000000e+00 : f32
    %38 = vector.broadcast %cst_24 : f32 to vector<32x2xf32>
    %39 = tpu.concatenate %14, %38 in 1 : vector<32x2xf32>, vector<32x2xf32> -> vector<32x4xf32>
    %40 = arith.addf %37, %39 : vector<32x4xf32>
    %41 = arith.negf %40 : vector<32x4xf32>
    %42 = math.exp %41 : vector<32x4xf32>
    %cst_25 = arith.constant 1.000000e+00 : f32
    %43 = vector.broadcast %cst_25 : f32 to vector<32x4xf32>
    %44 = arith.addf %43, %42 : vector<32x4xf32>
    %45 = arith.divf %43, %44 : vector<32x4xf32>
    %cst_26 = arith.constant 0.000000e+00 : f32
    %46 = vector.broadcast %cst_26 : f32 to vector<32x108xf32>
    %47 = tpu.concatenate %20, %45, %46 in 1 : vector<32x16xf32>, vector<32x4xf32>, vector<32x108xf32> -> vector<32x128xf32>
    %c0_27 = arith.constant 0 : index
    %c0_28 = arith.constant 0 : index
    %48 = vector.load %arg8[%c0_27, %c0_28] : memref<32x128xf32, #tpu.memory_space<vmem>>, vector<32x128xf32>
    tpu.vector_store %arg8[%c0_27, %c0_28], %47 {strides = array<i32>} : memref<32x128xf32, #tpu.memory_space<vmem>>, vector<32x128xf32>,
    return
  }
}

</mosaic_0001>

<llo_original>
// kernel: squeeze.7
$region0: #{squeeze.7}
  %s0 = inlined_call_operand.vmem [shape: f32[1,32,512], index: 0, kind: input, shape index: {}]
  %s1 = inlined_call_operand.vmem [shape: f32[32,2,256], index: 1, kind: output, shape index: {}]
  $region1: #{squeeze.7} parent=0
    #allocation0 [shape = 'u8[262144]{0}', space=vmem, size = 0x40000, scoped, tag = 'scoped mem for output reshape']
    %v2 = vld [vmem:[%s0] sm:$0xff]
    %3 = vst [vmem:[#allocation0] ss:$16 sm:$0x3] %v2
    %4 = vst [vmem:[#allocation0] ss:$16 sm:$0xc] %v2
    %5 = vst [vmem:[#allocation0] ss:$16 sm:$0x30] %v2
    %6 = vst [vmem:[#allocation0] ss:$16 sm:$0xc0] %v2
    %s7 = scalar_lea.vmem %s0, 8
    %v8 = vld [vmem:[%s7] sm:$0xff]
    %s9 = scalar_lea.vmem [#allocation0], 8
    %10 = vst [vmem:[%s9] ss:$16 sm:$0x3] %v8
    %s11 = scalar_lea.vmem [#allocation0], 8
    %12 = vst [vmem:[%s11] ss:$16 sm:$0xc] %v8
    %s13 = scalar_lea.vmem [#allocation0], 8
    %14 = vst [vmem:[%s13] ss:$16 sm:$0x30] %v8
    %s15 = scalar_lea.vmem [#allocation0], 8
    %16 = vst [vmem:[%s15] ss:$16 sm:$0xc0] %v8
    %s17 = scalar_lea.vmem %s0, 16
    %v18 = vld [vmem:[%s17] sm:$0xff]
    %s19 = scalar_lea.vmem [#allocation0], 1
    %20 = vst [vmem:[%s19] ss:$16 sm:$0x3] %v18
    %s21 = scalar_lea.vmem [#allocation0], 1
    %22 = vst [vmem:[%s21] ss:$16 sm:$0xc] %v18
    %s23 = scalar_lea.vmem [#allocation0], 1
    %24 = vst [vmem:[%s23] ss:$16 sm:$0x30] %v18
    %s25 = scalar_lea.vmem [#allocation0], 1
    %26 = vst [vmem:[%s25] ss:$16 sm:$0xc0] %v18
    %s27 = scalar_lea.vmem %s0, 24
    %v28 = vld [vmem:[%s27] sm:$0xff]
    %s29 = scalar_lea.vmem [#allocation0], 9
    %30 = vst [vmem:[%s29] ss:$16 sm:$0x3] %v28
    %s31 = scalar_lea.vmem [#allocation0], 9
    %32 = vst [vmem:[%s31] ss:$16 sm:$0xc] %v28
    %s33 = scalar_lea.vmem [#allocation0], 9
    %34 = vst [vmem:[%s33] ss:$16 sm:$0x30] %v28
    %s35 = scalar_lea.vmem [#allocation0], 9
    %36 = vst [vmem:[%s35] ss:$16 sm:$0xc0] %v28
    %s37 = scalar_lea.vmem %s0, 32
    %v38 = vld [vmem:[%s37] sm:$0xff]
    %s39 = scalar_lea.vmem [#allocation0], 128
    %40 = vst [vmem:[%s39] ss:$16 sm:$0x3] %v38
    %s41 = scalar_lea.vmem [#allocation0], 128
    %42 = vst [vmem:[%s41] ss:$16 sm:$0xc] %v38
    %s43 = scalar_lea.vmem [#allocation0], 128
    %44 = vst [vmem:[%s43] ss:$16 sm:$0x30] %v38
    %s45 = scalar_lea.vmem [#allocation0], 128
    %46 = vst [vmem:[%s45] ss:$16 sm:$0xc0] %v38
    %s47 = scalar_lea.vmem %s0, 40
    %v48 = vld [vmem:[%s47] sm:$0xff]
    %s49 = scalar_lea.vmem [#allocation0], 136
    %50 = vst [vmem:[%s49] ss:$16 sm:$0x3] %v48
    %s51 = scalar_lea.vmem [#allocation0], 136
    %52 = vst [vmem:[%s51] ss:$16 sm:$0xc] %v48
    %s53 = scalar_lea.vmem [#allocation0], 136
    %54 = vst [vmem:[%s53] ss:$16 sm:$0x30] %v48
    %s55 = scalar_lea.vmem [#allocation0], 136
    %56 = vst [vmem:[%s55] ss:$16 sm:$0xc0] %v48
    %s57 = scalar_lea.vmem %s0, 48
    %v58 = vld [vmem:[%s57] sm:$0xff]
    %s59 = scalar_lea.vmem [#allocation0], 129
    %60 = vst [vmem:[%s59] ss:$16 sm:$0x3] %v58
    %s61 = scalar_lea.vmem [#allocation0], 129
    %62 = vst [vmem:[%s61] ss:$16 sm:$0xc] %v58
    %s63 = scalar_lea.vmem [#allocation0], 129
    %64 = vst [vmem:[%s63] ss:$16 sm:$0x30] %v58
    %s65 = scalar_lea.vmem [#allocation0], 129
    %66 = vst [vmem:[%s65] ss:$16 sm:$0xc0] %v58
    %s67 = scalar_lea.vmem %s0, 56
    %v68 = vld [vmem:[%s67] sm:$0xff]
    %s69 = scalar_lea.vmem [#allocation0], 137
    %70 = vst [vmem:[%s69] ss:$16 sm:$0x3] %v68
    %s71 = scalar_lea.vmem [#allocation0], 137
    %72 = vst [vmem:[%s71] ss:$16 sm:$0xc] %v68
    %s73 = scalar_lea.vmem [#allocation0], 137
    %74 = vst [vmem:[%s73] ss:$16 sm:$0x30] %v68
    %s75 = scalar_lea.vmem [#allocation0], 137
    %76 = vst [vmem:[%s75] ss:$16 sm:$0xc0] %v68
    %s77 = scalar_lea.vmem %s0, 64
    %v78 = vld [vmem:[%s77] sm:$0xff]
    %s79 = scalar_lea.vmem [#allocation0], 256
    %80 = vst [vmem:[%s79] ss:$16 sm:$0x3] %v78
    %s81 = scalar_lea.vmem [#allocation0], 256
    %82 = vst [vmem:[%s81] ss:$16 sm:$0xc] %v78
    %s83 = scalar_lea.vmem [#allocation0], 256
    %84 = vst [vmem:[%s83] ss:$16 sm:$0x30] %v78
    %s85 = scalar_lea.vmem [#allocation0], 256
    %86 = vst [vmem:[%s85] ss:$16 sm:$0xc0] %v78
    %s87 = scalar_lea.vmem %s0, 72
    %v88 = vld [vmem:[%s87] sm:$0xff]
    %s89 = scalar_lea.vmem [#allocation0], 264
    %90 = vst [vmem:[%s89] ss:$16 sm:$0x3] %v88
    %s91 = scalar_lea.vmem [#allocation0], 264
    %92 = vst [vmem:[%s91] ss:$16 sm:$0xc] %v88
    %s93 = scalar_lea.vmem [#allocation0], 264
    %94 = vst [vmem:[%s93] ss:$16 sm:$0x30] %v88
    %s95 = scalar_lea.vmem [#allocation0], 264
    %96 = vst [vmem:[%s95] ss:$16 sm:$0xc0] %v88
    %s97 = scalar_lea.vmem %s0, 80
    %v98 = vld [vmem:[%s97] sm:$0xff]
    %s99 = scalar_lea.vmem [#allocation0], 257
    %100 = vst [vmem:[%s99] ss:$16 sm:$0x3] %v98
    %s101 = scalar_lea.vmem [#allocation0], 257
    %102 = vst [vmem:[%s101] ss:$16 sm:$0xc] %v98
    %s103 = scalar_lea.vmem [#allocation0], 257
    %104 = vst [vmem:[%s103] ss:$16 sm:$0x30] %v98
    %s105 = scalar_lea.vmem [#allocation0], 257
    %106 = vst [vmem:[%s105] ss:$16 sm:$0xc0] %v98
    %s107 = scalar_lea.vmem %s0, 88
    %v108 = vld [vmem:[%s107] sm:$0xff]
    %s109 = scalar_lea.vmem [#allocation0], 265
    %110 = vst [vmem:[%s109] ss:$16 sm:$0x3] %v108
    %s111 = scalar_lea.vmem [#allocation0], 265
    %112 = vst [vmem:[%s111] ss:$16 sm:$0xc] %v108
    %s113 = scalar_lea.vmem [#allocation0], 265
    %114 = vst [vmem:[%s113] ss:$16 sm:$0x30] %v108
    %s115 = scalar_lea.vmem [#allocation0], 265
    %116 = vst [vmem:[%s115] ss:$16 sm:$0xc0] %v108
    %s117 = scalar_lea.vmem %s0, 96
    %v118 = vld [vmem:[%s117] sm:$0xff]
    %s119 = scalar_lea.vmem [#allocation0], 384
    %120 = vst [vmem:[%s119] ss:$16 sm:$0x3] %v118
    %s121 = scalar_lea.vmem [#allocation0], 384
    %122 = vst [vmem:[%s121] ss:$16 sm:$0xc] %v118
    %s123 = scalar_lea.vmem [#allocation0], 384
    %124 = vst [vmem:[%s123] ss:$16 sm:$0x30] %v118
    %s125 = scalar_lea.vmem [#allocation0], 384
    %126 = vst [vmem:[%s125] ss:$16 sm:$0xc0] %v118
    %s127 = scalar_lea.vmem %s0, 104
    %v128 = vld [vmem:[%s127] sm:$0xff]
    %s129 = scalar_lea.vmem [#allocation0], 392
    %130 = vst [vmem:[%s129] ss:$16 sm:$0x3] %v128
    %s131 = scalar_lea.vmem [#allocation0], 392
    %132 = vst [vmem:[%s131] ss:$16 sm:$0xc] %v128
    %s133 = scalar_lea.vmem [#allocation0], 392
    %134 = vst [vmem:[%s133] ss:$16 sm:$0x30] %v128
    %s135 = scalar_lea.vmem [#allocation0], 392
    %136 = vst [vmem:[%s135] ss:$16 sm:$0xc0] %v128
    %s137 = scalar_lea.vmem %s0, 112
    %v138 = vld [vmem:[%s137] sm:$0xff]
    %s139 = scalar_lea.vmem [#allocation0], 385
    %140 = vst [vmem:[%s139] ss:$16 sm:$0x3] %v138
    %s141 = scalar_lea.vmem [#allocation0], 385
    %142 = vst [vmem:[%s141] ss:$16 sm:$0xc] %v138
    %s143 = scalar_lea.vmem [#allocation0], 385
    %144 = vst [vmem:[%s143] ss:$16 sm:$0x30] %v138
    %s145 = scalar_lea.vmem [#allocation0], 385
    %146 = vst [vmem:[%s145] ss:$16 sm:$0xc0] %v138
    %s147 = scalar_lea.vmem %s0, 120
    %v148 = vld [vmem:[%s147] sm:$0xff]
    %s149 = scalar_lea.vmem [#allocation0], 393
    %150 = vst [vmem:[%s149] ss:$16 sm:$0x3] %v148
    %s151 = scalar_lea.vmem [#allocation0], 393
    %152 = vst [vmem:[%s151] ss:$16 sm:$0xc] %v148
    %s153 = scalar_lea.vmem [#allocation0], 393
    %154 = vst [vmem:[%s153] ss:$16 sm:$0x30] %v148
    %s155 = scalar_lea.vmem [#allocation0], 393
    %156 = vst [vmem:[%s155] ss:$16 sm:$0xc0] %v148
    %s158 = sshllo.u32 0, 2
    %v160 = vld [vmem:[#allocation0] sm:%s158]
    %s161 = sshllo.u32 0, 2
    %162 = vst [vmem:[%s1] sm:%s161] %v160
    %s163 = scalar_lea.vmem [#allocation0], 8
    %v164 = vld [vmem:[%s163] sm:%s158]
    %s165 = sshllo.u32 0, 2
    %s166 = scalar_lea.vmem %s1, 2
    %167 = vst [vmem:[%s166] sm:%s165] %v164
    %s168 = scalar_lea.vmem [#allocation0], 16
    %v169 = vld [vmem:[%s168] sm:%s158]
    %s170 = sshllo.u32 0, 2
    %s171 = smul.addr 2, 2
    %s172 = scalar_lea.vmem %s1, %s171
    %173 = vst [vmem:[%s172] sm:%s170] %v169
    %s174 = scalar_lea.vmem [#allocation0], 24
    %v175 = vld [vmem:[%s174] sm:%s158]
    %s176 = sshllo.u32 0, 2
    %s177 = smul.addr 2, 3
    %s178 = scalar_lea.vmem %s1, %s177
    %179 = vst [vmem:[%s178] sm:%s176] %v175
    %s180 = scalar_lea.vmem [#allocation0], 32
    %v181 = vld [vmem:[%s180] sm:%s158]
    %s182 = sshllo.u32 0, 2
    %s183 = smul.addr 2, 4
    %s184 = scalar_lea.vmem %s1, %s183
    %185 = vst [vmem:[%s184] sm:%s182] %v181
    %s186 = scalar_lea.vmem [#allocation0], 40
    %v187 = vld [vmem:[%s186] sm:%s158]
    %s188 = sshllo.u32 0, 2
    %s189 = smul.addr 2, 5
    %s190 = scalar_lea.vmem %s1, %s189
    %191 = vst [vmem:[%s190] sm:%s188] %v187
    %s192 = scalar_lea.vmem [#allocation0], 48
    %v193 = vld [vmem:[%s192] sm:%s158]
    %s194 = sshllo.u32 0, 2
    %s195 = smul.addr 2, 6
    %s196 = scalar_lea.vmem %s1, %s195
    %197 = vst [vmem:[%s196] sm:%s194] %v193
    %s198 = scalar_lea.vmem [#allocation0], 56
    %v199 = vld [vmem:[%s198] sm:%s158]
    %s200 = sshllo.u32 0, 2
    %s201 = smul.addr 2, 7
    %s202 = scalar_lea.vmem %s1, %s201
    %203 = vst [vmem:[%s202] sm:%s200] %v199
    %s204 = scalar_lea.vmem [#allocation0], 64
    %v205 = vld [vmem:[%s204] sm:%s158]
    %s206 = sshllo.u32 0, 2
    %s207 = smul.addr 2, 8
    %s208 = scalar_lea.vmem %s1, %s207
    %209 = vst [vmem:[%s208] sm:%s206] %v205
    %s210 = scalar_lea.vmem [#allocation0], 72
    %v211 = vld [vmem:[%s210] sm:%s158]
    %s212 = sshllo.u32 0, 2
    %s213 = smul.addr 2, 9
    %s214 = scalar_lea.vmem %s1, %s213
    %215 = vst [vmem:[%s214] sm:%s212] %v211
    %s216 = scalar_lea.vmem [#allocation0], 80
    %v217 = vld [vmem:[%s216] sm:%s158]
    %s218 = sshllo.u32 0, 2
    %s219 = smul.addr 2, 10
    %s220 = scalar_lea.vmem %s1, %s219
    %221 = vst [vmem:[%s220] sm:%s218] %v217
    %s222 = scalar_lea.vmem [#allocation0], 88
    %v223 = vld [vmem:[%s222] sm:%s158]
    %s224 = sshllo.u32 0, 2
    %s225 = smul.addr 2, 11
    %s226 = scalar_lea.vmem %s1, %s225
    %227 = vst [vmem:[%s226] sm:%s224] %v223
    %s228 = scalar_lea.vmem [#allocation0], 96
    %v229 = vld [vmem:[%s228] sm:%s158]
    %s230 = sshllo.u32 0, 2
    %s231 = smul.addr 2, 12
    %s232 = scalar_lea.vmem %s1, %s231
    %233 = vst [vmem:[%s232] sm:%s230] %v229
    %s234 = scalar_lea.vmem [#allocation0], 104
    %v235 = vld [vmem:[%s234] sm:%s158]
    %s236 = sshllo.u32 0, 2
    %s237 = smul.addr 2, 13
    %s238 = scalar_lea.vmem %s1, %s237
    %239 = vst [vmem:[%s238] sm:%s236] %v235
    %s240 = scalar_lea.vmem [#allocation0], 112
    %v241 = vld [vmem:[%s240] sm:%s158]
    %s242 = sshllo.u32 0, 2
    %s243 = smul.addr 2, 14
    %s244 = scalar_lea.vmem %s1, %s243
    %245 = vst [vmem:[%s244] sm:%s242] %v241
    %s246 = scalar_lea.vmem [#allocation0], 120
    %v247 = vld [vmem:[%s246] sm:%s158]
    %s248 = sshllo.u32 0, 2
    %s249 = smul.addr 2, 15
    %s250 = scalar_lea.vmem %s1, %s249
    %251 = vst [vmem:[%s250] sm:%s248] %v247
    %s252 = scalar_lea.vmem [#allocation0], 128
    %v253 = vld [vmem:[%s252] sm:%s158]
    %s254 = sshllo.u32 0, 2
    %s255 = smul.addr 2, 16
    %s256 = scalar_lea.vmem %s1, %s255
    %257 = vst [vmem:[%s256] sm:%s254] %v253
    %s258 = scalar_lea.vmem [#allocation0], 136
    %v259 = vld [vmem:[%s258] sm:%s158]
    %s260 = sshllo.u32 0, 2
    %s261 = smul.addr 2, 17
    %s262 = scalar_lea.vmem %s1, %s261
    %263 = vst [vmem:[%s262] sm:%s260] %v259
    %s264 = scalar_lea.vmem [#allocation0], 144
    %v265 = vld [vmem:[%s264] sm:%s158]
    %s266 = sshllo.u32 0, 2
    %s267 = smul.addr 2, 18
    %s268 = scalar_lea.vmem %s1, %s267
    %269 = vst [vmem:[%s268] sm:%s266] %v265
    %s270 = scalar_lea.vmem [#allocation0], 152
    %v271 = vld [vmem:[%s270] sm:%s158]
    %s272 = sshllo.u32 0, 2
    %s273 = smul.addr 2, 19
    %s274 = scalar_lea.vmem %s1, %s273
    %275 = vst [vmem:[%s274] sm:%s272] %v271
    %s276 = scalar_lea.vmem [#allocation0], 160
    %v277 = vld [vmem:[%s276] sm:%s158]
    %s278 = sshllo.u32 0, 2
    %s279 = smul.addr 2, 20
    %s280 = scalar_lea.vmem %s1, %s279
    %281 = vst [vmem:[%s280] sm:%s278] %v277
    %s282 = scalar_lea.vmem [#allocation0], 168
    %v283 = vld [vmem:[%s282] sm:%s158]
    %s284 = sshllo.u32 0, 2
    %s285 = smul.addr 2, 21
    %s286 = scalar_lea.vmem %s1, %s285
    %287 = vst [vmem:[%s286] sm:%s284] %v283
    %s288 = scalar_lea.vmem [#allocation0], 176
    %v289 = vld [vmem:[%s288] sm:%s158]
    %s290 = sshllo.u32 0, 2
    %s291 = smul.addr 2, 22
    %s292 = scalar_lea.vmem %s1, %s291
    %293 = vst [vmem:[%s292] sm:%s290] %v289
    %s294 = scalar_lea.vmem [#allocation0], 184
    %v295 = vld [vmem:[%s294] sm:%s158]
    %s296 = sshllo.u32 0, 2
    %s297 = smul.addr 2, 23
    %s298 = scalar_lea.vmem %s1, %s297
    %299 = vst [vmem:[%s298] sm:%s296] %v295
    %s300 = scalar_lea.vmem [#allocation0], 192
    %v301 = vld [vmem:[%s300] sm:%s158]
    %s302 = sshllo.u32 0, 2
    %s303 = smul.addr 2, 24
    %s304 = scalar_lea.vmem %s1, %s303
    %305 = vst [vmem:[%s304] sm:%s302] %v301
    %s306 = scalar_lea.vmem [#allocation0], 200
    %v307 = vld [vmem:[%s306] sm:%s158]
    %s308 = sshllo.u32 0, 2
    %s309 = smul.addr 2, 25
    %s310 = scalar_lea.vmem %s1, %s309
    %311 = vst [vmem:[%s310] sm:%s308] %v307
    %s312 = scalar_lea.vmem [#allocation0], 208
    %v313 = vld [vmem:[%s312] sm:%s158]
    %s314 = sshllo.u32 0, 2
    %s315 = smul.addr 2, 26
    %s316 = scalar_lea.vmem %s1, %s315
    %317 = vst [vmem:[%s316] sm:%s314] %v313
    %s318 = scalar_lea.vmem [#allocation0], 216
    %v319 = vld [vmem:[%s318] sm:%s158]
    %s320 = sshllo.u32 0, 2
    %s321 = smul.addr 2, 27
    %s322 = scalar_lea.vmem %s1, %s321
    %323 = vst [vmem:[%s322] sm:%s320] %v319
    %s324 = scalar_lea.vmem [#allocation0], 224
    %v325 = vld [vmem:[%s324] sm:%s158]
    %s326 = sshllo.u32 0, 2
    %s327 = smul.addr 2, 28
    %s328 = scalar_lea.vmem %s1, %s327
    %329 = vst [vmem:[%s328] sm:%s326] %v325
    %s330 = scalar_lea.vmem [#allocation0], 232
    %v331 = vld [vmem:[%s330] sm:%s158]
    %s332 = sshllo.u32 0, 2
    %s333 = smul.addr 2, 29
    %s334 = scalar_lea.vmem %s1, %s333
    %335 = vst [vmem:[%s334] sm:%s332] %v331
    %s336 = scalar_lea.vmem [#allocation0], 240
    %v337 = vld [vmem:[%s336] sm:%s158]
    %s338 = sshllo.u32 0, 2
    %s339 = smul.addr 2, 30
    %s340 = scalar_lea.vmem %s1, %s339
    %341 = vst [vmem:[%s340] sm:%s338] %v337
    %s342 = scalar_lea.vmem [#allocation0], 248
    %v343 = vld [vmem:[%s342] sm:%s158]
    %s344 = sshllo.u32 0, 2
    %s345 = smul.addr 2, 31
    %s346 = scalar_lea.vmem %s1, %s345
    %347 = vst [vmem:[%s346] sm:%s344] %v343
    %s348 = scalar_lea.vmem [#allocation0], 256
    %v349 = vld [vmem:[%s348] sm:%s158]
    %s350 = sshllo.u32 0, 2
    %s351 = smul.addr 2, 32
    %s352 = scalar_lea.vmem %s1, %s351
    %353 = vst [vmem:[%s352] sm:%s350] %v349
    %s354 = scalar_lea.vmem [#allocation0], 264
    %v355 = vld [vmem:[%s354] sm:%s158]
    %s356 = sshllo.u32 0, 2
    %s357 = smul.addr 2, 33
    %s358 = scalar_lea.vmem %s1, %s357
    %359 = vst [vmem:[%s358] sm:%s356] %v355
    %s360 = scalar_lea.vmem [#allocation0], 272
    %v361 = vld [vmem:[%s360] sm:%s158]
    %s362 = sshllo.u32 0, 2
    %s363 = smul.addr 2, 34
    %s364 = scalar_lea.vmem %s1, %s363
    %365 = vst [vmem:[%s364] sm:%s362] %v361
    %s366 = scalar_lea.vmem [#allocation0], 280
    %v367 = vld [vmem:[%s366] sm:%s158]
    %s368 = sshllo.u32 0, 2
    %s369 = smul.addr 2, 35
    %s370 = scalar_lea.vmem %s1, %s369
    %371 = vst [vmem:[%s370] sm:%s368] %v367
    %s372 = scalar_lea.vmem [#allocation0], 288
    %v373 = vld [vmem:[%s372] sm:%s158]
    %s374 = sshllo.u32 0, 2
    %s375 = smul.addr 2, 36
    %s376 = scalar_lea.vmem %s1, %s375
    %377 = vst [vmem:[%s376] sm:%s374] %v373
    %s378 = scalar_lea.vmem [#allocation0], 296
    %v379 = vld [vmem:[%s378] sm:%s158]
    %s380 = sshllo.u32 0, 2
    %s381 = smul.addr 2, 37
    %s382 = scalar_lea.vmem %s1, %s381
    %383 = vst [vmem:[%s382] sm:%s380] %v379
    %s384 = scalar_lea.vmem [#allocation0], 304
    %v385 = vld [vmem:[%s384] sm:%s158]
    %s386 = sshllo.u32 0, 2
    %s387 = smul.addr 2, 38
    %s388 = scalar_lea.vmem %s1, %s387
    %389 = vst [vmem:[%s388] sm:%s386] %v385
    %s390 = scalar_lea.vmem [#allocation0], 312
    %v391 = vld [vmem:[%s390] sm:%s158]
    %s392 = sshllo.u32 0, 2
    %s393 = smul.addr 2, 39
    %s394 = scalar_lea.vmem %s1, %s393
    %395 = vst [vmem:[%s394] sm:%s392] %v391
    %s396 = scalar_lea.vmem [#allocation0], 320
    %v397 = vld [vmem:[%s396] sm:%s158]
    %s398 = sshllo.u32 0, 2
    %s399 = smul.addr 2, 40
    %s400 = scalar_lea.vmem %s1, %s399
    %401 = vst [vmem:[%s400] sm:%s398] %v397
    %s402 = scalar_lea.vmem [#allocation0], 328
    %v403 = vld [vmem:[%s402] sm:%s158]
    %s404 = sshllo.u32 0, 2
    %s405 = smul.addr 2, 41
    %s406 = scalar_lea.vmem %s1, %s405
    %407 = vst [vmem:[%s406] sm:%s404] %v403
    %s408 = scalar_lea.vmem [#allocation0], 336
    %v409 = vld [vmem:[%s408] sm:%s158]
    %s410 = sshllo.u32 0, 2
    %s411 = smul.addr 2, 42
    %s412 = scalar_lea.vmem %s1, %s411
    %413 = vst [vmem:[%s412] sm:%s410] %v409
    %s414 = scalar_lea.vmem [#allocation0], 344
    %v415 = vld [vmem:[%s414] sm:%s158]
    %s416 = sshllo.u32 0, 2
    %s417 = smul.addr 2, 43
    %s418 = scalar_lea.vmem %s1, %s417
    %419 = vst [vmem:[%s418] sm:%s416] %v415
    %s420 = scalar_lea.vmem [#allocation0], 352
    %v421 = vld [vmem:[%s420] sm:%s158]
    %s422 = sshllo.u32 0, 2
    %s423 = smul.addr 2, 44
    %s424 = scalar_lea.vmem %s1, %s423
    %425 = vst [vmem:[%s424] sm:%s422] %v421
    %s426 = scalar_lea.vmem [#allocation0], 360
    %v427 = vld [vmem:[%s426] sm:%s158]
    %s428 = sshllo.u32 0, 2
    %s429 = smul.addr 2, 45
    %s430 = scalar_lea.vmem %s1, %s429
    %431 = vst [vmem:[%s430] sm:%s428] %v427
    %s432 = scalar_lea.vmem [#allocation0], 368
    %v433 = vld [vmem:[%s432] sm:%s158]
    %s434 = sshllo.u32 0, 2
    %s435 = smul.addr 2, 46
    %s436 = scalar_lea.vmem %s1, %s435
    %437 = vst [vmem:[%s436] sm:%s434] %v433
    %s438 = scalar_lea.vmem [#allocation0], 376
    %v439 = vld [vmem:[%s438] sm:%s158]
    %s440 = sshllo.u32 0, 2
    %s441 = smul.addr 2, 47
    %s442 = scalar_lea.vmem %s1, %s441
    %443 = vst [vmem:[%s442] sm:%s440] %v439
    %s444 = scalar_lea.vmem [#allocation0], 384
    %v445 = vld [vmem:[%s444] sm:%s158]
    %s446 = sshllo.u32 0, 2
    %s447 = smul.addr 2, 48
    %s448 = scalar_lea.vmem %s1, %s447
    %449 = vst [vmem:[%s448] sm:%s446] %v445
    %s450 = scalar_lea.vmem [#allocation0], 392
    %v451 = vld [vmem:[%s450] sm:%s158]
    %s452 = sshllo.u32 0, 2
    %s453 = smul.addr 2, 49
    %s454 = scalar_lea.vmem %s1, %s453
    %455 = vst [vmem:[%s454] sm:%s452] %v451
    %s456 = scalar_lea.vmem [#allocation0], 400
    %v457 = vld [vmem:[%s456] sm:%s158]
    %s458 = sshllo.u32 0, 2
    %s459 = smul.addr 2, 50
    %s460 = scalar_lea.vmem %s1, %s459
    %461 = vst [vmem:[%s460] sm:%s458] %v457
    %s462 = scalar_lea.vmem [#allocation0], 408
    %v463 = vld [vmem:[%s462] sm:%s158]
    %s464 = sshllo.u32 0, 2
    %s465 = smul.addr 2, 51
    %s466 = scalar_lea.vmem %s1, %s465
    %467 = vst [vmem:[%s466] sm:%s464] %v463
    %s468 = scalar_lea.vmem [#allocation0], 416
    %v469 = vld [vmem:[%s468] sm:%s158]
    %s470 = sshllo.u32 0, 2
    %s471 = smul.addr 2, 52
    %s472 = scalar_lea.vmem %s1, %s471
    %473 = vst [vmem:[%s472] sm:%s470] %v469
    %s474 = scalar_lea.vmem [#allocation0], 424
    %v475 = vld [vmem:[%s474] sm:%s158]
    %s476 = sshllo.u32 0, 2
    %s477 = smul.addr 2, 53
    %s478 = scalar_lea.vmem %s1, %s477
    %479 = vst [vmem:[%s478] sm:%s476] %v475
    %s480 = scalar_lea.vmem [#allocation0], 432
    %v481 = vld [vmem:[%s480] sm:%s158]
    %s482 = sshllo.u32 0, 2
    %s483 = smul.addr 2, 54
    %s484 = scalar_lea.vmem %s1, %s483
    %485 = vst [vmem:[%s484] sm:%s482] %v481
    %s486 = scalar_lea.vmem [#allocation0], 440
    %v487 = vld [vmem:[%s486] sm:%s158]
    %s488 = sshllo.u32 0, 2
    %s489 = smul.addr 2, 55
    %s490 = scalar_lea.vmem %s1, %s489
    %491 = vst [vmem:[%s490] sm:%s488] %v487
    %s492 = scalar_lea.vmem [#allocation0], 448
    %v493 = vld [vmem:[%s492] sm:%s158]
    %s494 = sshllo.u32 0, 2
    %s495 = smul.addr 2, 56
    %s496 = scalar_lea.vmem %s1, %s495
    %497 = vst [vmem:[%s496] sm:%s494] %v493
    %s498 = scalar_lea.vmem [#allocation0], 456
    %v499 = vld [vmem:[%s498] sm:%s158]
    %s500 = sshllo.u32 0, 2
    %s501 = smul.addr 2, 57
    %s502 = scalar_lea.vmem %s1, %s501
    %503 = vst [vmem:[%s502] sm:%s500] %v499
    %s504 = scalar_lea.vmem [#allocation0], 464
    %v505 = vld [vmem:[%s504] sm:%s158]
    %s506 = sshllo.u32 0, 2
    %s507 = smul.addr 2, 58
    %s508 = scalar_lea.vmem %s1, %s507
    %509 = vst [vmem:[%s508] sm:%s506] %v505
    %s510 = scalar_lea.vmem [#allocation0], 472
    %v511 = vld [vmem:[%s510] sm:%s158]
    %s512 = sshllo.u32 0, 2
    %s513 = smul.addr 2, 59
    %s514 = scalar_lea.vmem %s1, %s513
    %515 = vst [vmem:[%s514] sm:%s512] %v511
    %s516 = scalar_lea.vmem [#allocation0], 480
    %v517 = vld [vmem:[%s516] sm:%s158]
    %s518 = sshllo.u32 0, 2
    %s519 = smul.addr 2, 60
    %s520 = scalar_lea.vmem %s1, %s519
    %521 = vst [vmem:[%s520] sm:%s518] %v517
    %s522 = scalar_lea.vmem [#allocation0], 488
    %v523 = vld [vmem:[%s522] sm:%s158]
    %s524 = sshllo.u32 0, 2
    %s525 = smul.addr 2, 61
    %s526 = scalar_lea.vmem %s1, %s525
    %527 = vst [vmem:[%s526] sm:%s524] %v523
    %s528 = scalar_lea.vmem [#allocation0], 496
    %v529 = vld [vmem:[%s528] sm:%s158]
    %s530 = sshllo.u32 0, 2
    %s531 = smul.addr 2, 62
    %s532 = scalar_lea.vmem %s1, %s531
    %533 = vst [vmem:[%s532] sm:%s530] %v529
    %s534 = scalar_lea.vmem [#allocation0], 504
    %v535 = vld [vmem:[%s534] sm:%s158]
    %s536 = sshllo.u32 0, 2
    %s537 = smul.addr 2, 63
    %s538 = scalar_lea.vmem %s1, %s537
    %539 = vst [vmem:[%s538] sm:%s536] %v535

// kernel: deformable_detr_forward.2
$region0: #{deformable_detr_forward.2}
  #allocation0 [shape = 'u32[]', space=smem, size = 0x4, offset = 0x4, fixed_abs, tag = 'smem constant byte address 0x4 - core index']
  #allocation1 [shape = 'u32[144,128]{1,0:T(1,128)}', space=vmem, size = 0x12000, scoped, tag = 'internal scratch']
  #allocation2 [shape = 's32[1]{0}', space=sflag, size = 0x4, scoped, tag = 'scoped memory for deformable_detr_forward.2']
  #allocation3 [shape = 'u8[512]{0}', space=smem, size = 0x200, scoped, tag = 'prefetched SMEM operand 0']
  %s0 = inlined_call_operand.vmem [shape: s32[3], index: 0, kind: input, shape index: {}]
  %s1 = inlined_call_operand.vmem [shape: bf16[3,144,512], index: 1, kind: input, shape index: {}]
  %s2 = inlined_call_operand.vmem [shape: bf16[3,32,144], index: 2, kind: input, shape index: {}]
  %s3 = inlined_call_operand.vmem [shape: f32[3,32,1], index: 3, kind: input, shape index: {}]
  %s4 = inlined_call_operand.vmem [shape: f32[3,32,1], index: 4, kind: input, shape index: {}]
  %s5 = inlined_call_operand.vmem [shape: f32[3,32,1], index: 5, kind: input, shape index: {}]
  %s6 = inlined_call_operand.vmem [shape: f32[3,32,512], index: 6, kind: output, shape index: {}]
  %s7 = sld [smem:[#allocation0]]
  $region53: #{deformable_detr_forward.2} parent=0
    _
  %s9 = ssub.s32 1, %s7
  %s10 = scalar_select 0, %s9, %s7
  %s11 = sshll.u32 %s0, 4
  %s12 = int_to_ptr.vmem [resolvable:$true] %s11
  %14 = dma.vmem_to_smem %s12, 16, [#allocation3], [#allocation2]
  %15 = dma.done [#allocation2], 16
  %16 = sfence
  loop: start=0, step=1, limit=5
  $region2: #{deformable_detr_forward.2} parent=0 // loop_pre_header
    _
  $region3: #{deformable_detr_forward.2} parent=0 // loop_header
    %s18 = sphi 0, %s22
    %p19 = scmp.ge.s32.totalorder %s18, 5
    %s28 = sphi 0, %s30
    %s31 = sphi 0, %s28
    %s32 = sphi 0, %s31
    %s48 = sphi 0, %s32
    %s54 = sphi 0, %s56
    %s57 = sphi 0, %s54
    %s58 = sphi 0, %s57
    %s74 = sphi 0, %s58
    %s80 = sphi 0, %s82
    %s83 = sphi 0, %s80
    %s84 = sphi 0, %s83
    %s100 = sphi 0, %s84
    %s106 = sphi 0, %s108
    %s109 = sphi 0, %s106
    %s110 = sphi 0, %s109
    %s126 = sphi 0, %s110
    %s132 = sphi 0, %s134
    %s135 = sphi 0, %s132
    %s136 = sphi 0, %s135
    %s152 = sphi 0, %s136
    %s158 = sphi 0, %s160
    %s161 = sphi 0, %s158
    %s162 = sphi 0, %s161
    %s178 = sphi 0, %s162
  $region4: #{deformable_detr_forward.2} parent=0 // loop_header_branch
    %21 = sbr.rel (%p19) target = $region8
  $region5: #{deformable_detr_forward.2} parent=0 // loop_body
    %s23 = ssub.s32 %s18, 1
    %s24 = ssub.s32 %s18, 2
    %s25 = sadd.s32 %s18, 1
    %s26 = ssub.s32 %s18, %s25
    %p27 = scmp.eq.s32.totalorder %s26, 0
    %s29 = sadd.s32 %s28, 1
    %s30 = scalar_select %p27, %s28, %s29
    %p33 = pneg %p27
    %p34 = scmp.eq.s32.totalorder %s18, 2
    %p35 = por %p33, %p34
    %p36 = scmp.ne.s32.totalorder %s28, %s31
    %p37 = scmp.eq.s32.totalorder %s18, 0
    %p38 = por %p36, %p37
    %p39 = scmp.ne.s32.totalorder %s28, %s31
    %p40 = scmp.eq.s32.totalorder %s23, 2
    %p41 = por %p39, %p40
    %p42 = scmp.ne.s32.totalorder %s31, %s32
    %p43 = scmp.eq.s32.totalorder %s23, 0
    %p44 = por %p42, %p43
    %p45 = scmp.ne.s32.totalorder %s31, %s32
    %p46 = scmp.eq.s32.totalorder %s24, 2
    %p47 = por %p45, %p46
    %p49 = scmp.ne.s32.totalorder %s32, %s48
    %p50 = scmp.eq.s32.totalorder %s24, 0
    %p51 = por %p49, %p50
    %s52 = ssub.s32 %s18, %s25
    %p53 = scmp.eq.s32.totalorder %s52, 0
    %s55 = sadd.s32 %s54, 1
    %s56 = scalar_select %p53, %s54, %s55
    %p59 = pneg %p53
    %p60 = scmp.eq.s32.totalorder %s18, 2
    %p61 = por %p59, %p60
    %p62 = scmp.ne.s32.totalorder %s54, %s57
    %p63 = scmp.eq.s32.totalorder %s18, 0
    %p64 = por %p62, %p63
    %p65 = scmp.ne.s32.totalorder %s54, %s57
    %p66 = scmp.eq.s32.totalorder %s23, 2
    %p67 = por %p65, %p66
    %p68 = scmp.ne.s32.totalorder %s57, %s58
    %p69 = scmp.eq.s32.totalorder %s23, 0
    %p70 = por %p68, %p69
    %p71 = scmp.ne.s32.totalorder %s57, %s58
    %p72 = scmp.eq.s32.totalorder %s24, 2
    %p73 = por %p71, %p72
    %p75 = scmp.ne.s32.totalorder %s58, %s74
    %p76 = scmp.eq.s32.totalorder %s24, 0
    %p77 = por %p75, %p76
    %s78 = ssub.s32 %s18, %s25
    %p79 = scmp.eq.s32.totalorder %s78, 0
    %s81 = sadd.s32 %s80, 1
    %s82 = scalar_select %p79, %s80, %s81
    %p85 = pneg %p79
    %p86 = scmp.eq.s32.totalorder %s18, 2
    %p87 = por %p85, %p86
    %p88 = scmp.ne.s32.totalorder %s80, %s83
    %p89 = scmp.eq.s32.totalorder %s18, 0
    %p90 = por %p88, %p89
    %p91 = scmp.ne.s32.totalorder %s80, %s83
    %p92 = scmp.eq.s32.totalorder %s23, 2
    %p93 = por %p91, %p92
    %p94 = scmp.ne.s32.totalorder %s83, %s84
    %p95 = scmp.eq.s32.totalorder %s23, 0
    %p96 = por %p94, %p95
    %p97 = scmp.ne.s32.totalorder %s83, %s84
    %p98 = scmp.eq.s32.totalorder %s24, 2
    %p99 = por %p97, %p98
    %p101 = scmp.ne.s32.totalorder %s84, %s100
    %p102 = scmp.eq.s32.totalorder %s24, 0
    %p103 = por %p101, %p102
    %s104 = ssub.s32 %s18, %s25
    %p105 = scmp.eq.s32.totalorder %s104, 0
    %s107 = sadd.s32 %s106, 1
    %s108 = scalar_select %p105, %s106, %s107
    %p111 = pneg %p105
    %p112 = scmp.eq.s32.totalorder %s18, 2
    %p113 = por %p111, %p112
    %p114 = scmp.ne.s32.totalorder %s106, %s109
    %p115 = scmp.eq.s32.totalorder %s18, 0
    %p116 = por %p114, %p115
    %p117 = scmp.ne.s32.totalorder %s106, %s109
    %p118 = scmp.eq.s32.totalorder %s23, 2
    %p119 = por %p117, %p118
    %p120 = scmp.ne.s32.totalorder %s109, %s110
    %p121 = scmp.eq.s32.totalorder %s23, 0
    %p122 = por %p120, %p121
    %p123 = scmp.ne.s32.totalorder %s109, %s110
    %p124 = scmp.eq.s32.totalorder %s24, 2
    %p125 = por %p123, %p124
    %p127 = scmp.ne.s32.totalorder %s110, %s126
    %p128 = scmp.eq.s32.totalorder %s24, 0
    %p129 = por %p127, %p128
    %s130 = ssub.s32 %s18, %s25
    %p131 = scmp.eq.s32.totalorder %s130, 0
    %s133 = sadd.s32 %s132, 1
    %s134 = scalar_select %p131, %s132, %s133
    %p137 = pneg %p131
    %p138 = scmp.eq.s32.totalorder %s18, 2
    %p139 = por %p137, %p138
    %p140 = scmp.ne.s32.totalorder %s132, %s135
    %p141 = scmp.eq.s32.totalorder %s18, 0
    %p142 = por %p140, %p141
    %p143 = scmp.ne.s32.totalorder %s132, %s135
    %p144 = scmp.eq.s32.totalorder %s23, 2
    %p145 = por %p143, %p144
    %p146 = scmp.ne.s32.totalorder %s135, %s136
    %p147 = scmp.eq.s32.totalorder %s23, 0
    %p148 = por %p146, %p147
    %p149 = scmp.ne.s32.totalorder %s135, %s136
    %p150 = scmp.eq.s32.totalorder %s24, 2
    %p151 = por %p149, %p150
    %p153 = scmp.ne.s32.totalorder %s136, %s152
    %p154 = scmp.eq.s32.totalorder %s24, 0
    %p155 = por %p153, %p154
    %s156 = ssub.s32 %s18, %s25
    %p157 = scmp.eq.s32.totalorder %s156, 0
    %s159 = sadd.s32 %s158, 1
    %s160 = scalar_select %p157, %s158, %s159
    %p163 = pneg %p157
    %p164 = scmp.eq.s32.totalorder %s18, 2
    %p165 = por %p163, %p164
    %p166 = scmp.ne.s32.totalorder %s158, %s161
    %p167 = scmp.eq.s32.totalorder %s18, 0
    %p168 = por %p166, %p167
    %p169 = scmp.ne.s32.totalorder %s158, %s161
    %p170 = scmp.eq.s32.totalorder %s23, 2
    %p171 = por %p169, %p170
    %p172 = scmp.ne.s32.totalorder %s161, %s162
    %p173 = scmp.eq.s32.totalorder %s23, 0
    %p174 = por %p172, %p173
    %p175 = scmp.ne.s32.totalorder %s161, %s162
    %p176 = scmp.eq.s32.totalorder %s24, 2
    %p177 = por %p175, %p176
    %p179 = scmp.ne.s32.totalorder %s162, %s178
    %p180 = scmp.eq.s32.totalorder %s24, 0
    %p181 = por %p179, %p180
    %p182 = scmp.le.s32.totalorder 1, %s18
    %p183 = scmp.lt.s32.totalorder %s18, 4
    %p184 = pnand %p182, %p183
    %p185 = pneg %p184
    // Predicated region
    $region9: #{deformable_detr_forward.2} parent=5 // pred_check
      _
    $region10: #{deformable_detr_forward.2} parent=5 // pred_check_branch
      %187 = sbr.rel (%p184) target = $region12
    $region11: #{deformable_detr_forward.2} parent=5 // pred_region
      %s188 = ssub.s32 %s18, 1
    $region12: #{deformable_detr_forward.2} parent=5 // pred_fallthru
      _
    %p189 = scmp.lt.s32.totalorder %s18, 3
    // Predicated region
    $region13: #{deformable_detr_forward.2} parent=5 // pred_check
      %p190 = pneg %p189
    $region14: #{deformable_detr_forward.2} parent=5 // pred_check_branch
      %192 = sbr.rel (%p190) target = $region16
    $region15: #{deformable_detr_forward.2} parent=5 // pred_region
      // Predicated region
      $region17: #{deformable_detr_forward.2} parent=15 // pred_check
        %p193 = pneg %p38
      $region18: #{deformable_detr_forward.2} parent=15 // pred_check_branch
        %195 = sbr.rel (%p193) target = $region20
      $region19: #{deformable_detr_forward.2} parent=15 // pred_region
        %p196 = scmp.lt.s32.totalorder %s18, 2
        %s197 = scalar_select %p196, %s18, 2
        %s198 = smul.addr %s197, 72
        %s199 = smul.addr %s198, 4
        %s200 = scalar_lea.vmem %s1, %s199
      $region20: #{deformable_detr_forward.2} parent=15 // pred_fallthru
        _
      // Predicated region
      $region21: #{deformable_detr_forward.2} parent=15 // pred_check
        %p201 = pneg %p64
      $region22: #{deformable_detr_forward.2} parent=15 // pred_check_branch
        %203 = sbr.rel (%p201) target = $region24
      $region23: #{deformable_detr_forward.2} parent=15 // pred_region
        %p204 = scmp.lt.s32.totalorder %s18, 2
        %s205 = scalar_select %p204, %s18, 2
        %s206 = smul.addr %s205, 8
        %s207 = smul.addr %s206, 4
        %s208 = scalar_lea.vmem %s2, %s207
      $region24: #{deformable_detr_forward.2} parent=15 // pred_fallthru
        _
      // Predicated region
      $region25: #{deformable_detr_forward.2} parent=15 // pred_check
        %p209 = pneg %p90
      $region26: #{deformable_detr_forward.2} parent=15 // pred_check_branch
        %211 = sbr.rel (%p209) target = $region28
      $region27: #{deformable_detr_forward.2} parent=15 // pred_region
        %p212 = scmp.lt.s32.totalorder %s18, 2
        %s213 = scalar_select %p212, %s18, 2
        %s214 = smul.addr %s213, 4
        %s215 = smul.addr %s214, 8
        %s216 = scalar_lea.vmem %s3, %s215
      $region28: #{deformable_detr_forward.2} parent=15 // pred_fallthru
        _
      // Predicated region
      $region29: #{deformable_detr_forward.2} parent=15 // pred_check
        %p217 = pneg %p116
      $region30: #{deformable_detr_forward.2} parent=15 // pred_check_branch
        %219 = sbr.rel (%p217) target = $region32
      $region31: #{deformable_detr_forward.2} parent=15 // pred_region
        %p220 = scmp.lt.s32.totalorder %s18, 2
        %s221 = scalar_select %p220, %s18, 2
        %s222 = smul.addr %s221, 4
        %s223 = smul.addr %s222, 8
        %s224 = scalar_lea.vmem %s4, %s223
      $region32: #{deformable_detr_forward.2} parent=15 // pred_fallthru
        _
      // Predicated region
      $region33: #{deformable_detr_forward.2} parent=15 // pred_check
        %p225 = pneg %p142
      $region34: #{deformable_detr_forward.2} parent=15 // pred_check_branch
        %227 = sbr.rel (%p225) target = $region36
      $region35: #{deformable_detr_forward.2} parent=15 // pred_region
        %p228 = scmp.lt.s32.totalorder %s18, 2
        %s229 = scalar_select %p228, %s18, 2
        %s230 = smul.addr %s229, 4
        %s231 = smul.addr %s230, 8
        %s232 = scalar_lea.vmem %s5, %s231
      $region36: #{deformable_detr_forward.2} parent=15 // pred_fallthru
        _
    $region16: #{deformable_detr_forward.2} parent=5 // pred_fallthru
      _
    %p233 = scmp.le.s32.totalorder 1, %s18
    %p234 = scmp.lt.s32.totalorder %s18, 4
    %p235 = pnand %p233, %p234
    %p236 = pneg %p235
    // Predicated region
    $region37: #{deformable_detr_forward.2} parent=5 // pred_check
      _
    $region38: #{deformable_detr_forward.2} parent=5 // pred_check_branch
      %238 = sbr.rel (%p235) target = $region40
    $region39: #{deformable_detr_forward.2} parent=5 // pred_region
      %s239 = ssub.s32 %s18, 1
      %p240 = scmp.lt.s32.totalorder %s23, 2
      %s241 = scalar_select %p240, %s23, 2
      %s242 = smul.addr %s241, 72
      %s243 = smul.addr %s242, 4
      %s244 = scalar_lea.vmem %s1, %s243
      %p245 = pneg %p44
      %p246 = pneg %p41
      %p247 = scmp.lt.s32.totalorder %s23, 2
      %s248 = scalar_select %p247, %s23, 2
      %s249 = smul.addr %s248, 8
      %s250 = smul.addr %s249, 4
      %s251 = scalar_lea.vmem %s2, %s250
      %p252 = pneg %p70
      %p253 = pneg %p67
      %p254 = scmp.lt.s32.totalorder %s23, 2
      %s255 = scalar_select %p254, %s23, 2
      %s256 = smul.addr %s255, 4
      %s257 = smul.addr %s256, 8
      %s258 = scalar_lea.vmem %s3, %s257
      %p259 = pneg %p96
      %p260 = pneg %p93
      %p261 = scmp.lt.s32.totalorder %s23, 2
      %s262 = scalar_select %p261, %s23, 2
      %s263 = smul.addr %s262, 4
      %s264 = smul.addr %s263, 8
      %s265 = scalar_lea.vmem %s4, %s264
      %p266 = pneg %p122
      %p267 = pneg %p119
      %p268 = scmp.lt.s32.totalorder %s23, 2
      %s269 = scalar_select %p268, %s23, 2
      %s270 = smul.addr %s269, 4
      %s271 = smul.addr %s270, 8
      %s272 = scalar_lea.vmem %s5, %s271
      %p273 = pneg %p148
      %p274 = pneg %p145
      %p275 = pneg %p174
      %p276 = pneg %p171
      %p277 = scmp.lt.s32.totalorder %s23, 2
      %s278 = scalar_select %p277, %s23, 2
      %s279 = smul.addr %s278, 16
      %s280 = smul.addr %s279, 8
      %s281 = scalar_lea.vmem %s6, %s280
      %p282 = scmp.lt.s32.totalorder %s23, 2
      %s283 = scalar_select %p282, %s23, 2
      %s284 = smul.addr %s283, 72
      %s285 = smul.addr %s284, 4
      %s286 = scalar_lea.vmem %s1, %s285
      %p287 = scmp.lt.s32.totalorder %s23, 2
      %s288 = scalar_select %p287, %s23, 2
      %s289 = smul.addr %s288, 8
      %s290 = smul.addr %s289, 4
      %s291 = scalar_lea.vmem %s2, %s290
      %p292 = scmp.lt.s32.totalorder %s23, 2
      %s293 = scalar_select %p292, %s23, 2
      %s294 = smul.addr %s293, 4
      %s295 = smul.addr %s294, 8
      %s296 = scalar_lea.vmem %s3, %s295
      %p297 = scmp.lt.s32.totalorder %s23, 2
      %s298 = scalar_select %p297, %s23, 2
      %s299 = smul.addr %s298, 4
      %s300 = smul.addr %s299, 8
      %s301 = scalar_lea.vmem %s4, %s300
      %p302 = scmp.lt.s32.totalorder %s23, 2
      %s303 = scalar_select %p302, %s23, 2
      %s304 = smul.addr %s303, 4
      %s305 = smul.addr %s304, 8
      %s306 = scalar_lea.vmem %s5, %s305
      %p307 = scmp.lt.s32.totalorder %s23, 2
      %s308 = scalar_select %p307, %s23, 2
      %s309 = smul.addr %s308, 16
      %s310 = smul.addr %s309, 8
      %s311 = scalar_lea.vmem %s6, %s310
      %s313 = sld [smem:[#allocation3 + %s23]]
      %v314 = vld [vmem:[%s286] sm:$0xff]
      %v315 = vld [vmem:[%s286 + $0x8] sm:$0xff]
      %v316 = vld [vmem:[%s286 + $0x10] sm:$0xff]
      %v317 = vld [vmem:[%s286 + $0x18] sm:$0xff]
      %v318 = vld [vmem:[%s286 + $0x20] sm:$0xff]
      %v319 = vld [vmem:[%s286 + $0x28] sm:$0xff]
      %v320 = vld [vmem:[%s286 + $0x30] sm:$0xff]
      %v321 = vld [vmem:[%s286 + $0x38] sm:$0xff]
      %v322 = vld [vmem:[%s286 + $0x40] sm:$0xff]
      %v323 = vld [vmem:[%s286 + $0x48] sm:$0xff]
      %v324 = vld [vmem:[%s286 + $0x50] sm:$0xff]
      %v325 = vld [vmem:[%s286 + $0x58] sm:$0xff]
      %v326 = vld [vmem:[%s286 + $0x60] sm:$0xff]
      %v327 = vld [vmem:[%s286 + $0x68] sm:$0xff]
      %v328 = vld [vmem:[%s286 + $0x70] sm:$0xff]
      %v329 = vld [vmem:[%s286 + $0x78] sm:$0xff]
      %v330 = vld [vmem:[%s286 + $0x80] sm:$0xff]
      %v331 = vld [vmem:[%s286 + $0x88] sm:$0xff]
      %v332 = vld [vmem:[%s286 + $0x90] sm:$0xff]
      %v333 = vld [vmem:[%s286 + $0x98] sm:$0xff]
      %v334 = vld [vmem:[%s286 + $0xa0] sm:$0xff]
      %v335 = vld [vmem:[%s286 + $0xa8] sm:$0xff]
      %v336 = vld [vmem:[%s286 + $0xb0] sm:$0xff]
      %v337 = vld [vmem:[%s286 + $0xb8] sm:$0xff]
      %v338 = vld [vmem:[%s286 + $0xc0] sm:$0xff]
      %v339 = vld [vmem:[%s286 + $0xc8] sm:$0xff]
      %v340 = vld [vmem:[%s286 + $0xd0] sm:$0xff]
      %v341 = vld [vmem:[%s286 + $0xd8] sm:$0xff]
      %v342 = vld [vmem:[%s286 + $0xe0] sm:$0xff]
      %v343 = vld [vmem:[%s286 + $0xe8] sm:$0xff]
      %v344 = vld [vmem:[%s286 + $0xf0] sm:$0xff]
      %v345 = vld [vmem:[%s286 + $0xf8] sm:$0xff]
      %v346 = vld [vmem:[%s286 + $0x100] sm:$0xff]
      %v347 = vld [vmem:[%s286 + $0x108] sm:$0xff]
      %v348 = vld [vmem:[%s286 + $0x110] sm:$0xff]
      %v349 = vld [vmem:[%s286 + $0x118] sm:$0xff]
      %v350 = vld [vmem:[%s291] sm:$0xff]
      %v351 = vld [vmem:[%s291 + $0x8] sm:$0xff]
      %v352 = vld [vmem:[%s291 + $0x10] sm:$0xff]
      %v353 = vld [vmem:[%s291 + $0x18] sm:$0xff]
      %v354 = vld [vmem:[%s296] sm:$0xff]
      %v355 = vld [vmem:[%s296 + $0x8] sm:$0xff]
      %v356 = vld [vmem:[%s296 + $0x10] sm:$0xff]
      %v357 = vld [vmem:[%s296 + $0x18] sm:$0xff]
      %359 = vset.pattern.permute.xlu0 0
      %360 = vperm.xlu0 %359, %v354
      %v361 = vpop.permute.xlu0 %360
      %364 = vset.pattern.permute.xlu0 0
      %365 = vperm.xlu0 %364, %v355
      %v366 = vpop.permute.xlu0 %365
      %369 = vset.pattern.permute.xlu0 0
      %370 = vperm.xlu0 %369, %v356
      %v371 = vpop.permute.xlu0 %370
      %374 = vset.pattern.permute.xlu0 0
      %375 = vperm.xlu0 %374, %v357
      %v376 = vpop.permute.xlu0 %375
      %v382 = vunpack.c.l.b16 %v350
      %v383 = vunpack.c.h.b16 %v350
      %v384 = vunpack.c.l.b16 %v351
      %v385 = vunpack.c.h.b16 %v351
      %v386 = vunpack.c.l.b16 %v352
      %v387 = vunpack.c.h.b16 %v352
      %v388 = vunpack.c.l.b16 %v353
      %v389 = vunpack.c.h.b16 %v353
      %v390 = vpack.c.b16 %v384, %v382
      %v391 = vpack.c.b16 %v385, %v383
      %v392 = vpack.c.b16 %v388, %v386
      %v393 = vpack.c.b16 %v389, %v387
      %v432 = vunpack.c.l.b16 %v314
      %v433 = vunpack.c.h.b16 %v314
      %v434 = vunpack.c.l.b16 %v315
      %v435 = vunpack.c.h.b16 %v315
      %v436 = vunpack.c.l.b16 %v316
      %v437 = vunpack.c.h.b16 %v316
      %v438 = vunpack.c.l.b16 %v317
      %v439 = vunpack.c.h.b16 %v317
      %v440 = vunpack.c.l.b16 %v318
      %v441 = vunpack.c.h.b16 %v318
      %v442 = vunpack.c.l.b16 %v319
      %v443 = vunpack.c.h.b16 %v319
      %v444 = vunpack.c.l.b16 %v320
      %v445 = vunpack.c.h.b16 %v320
      %v446 = vunpack.c.l.b16 %v321
      %v447 = vunpack.c.h.b16 %v321
      %v448 = vunpack.c.l.b16 %v322
      %v449 = vunpack.c.h.b16 %v322
      %v450 = vunpack.c.l.b16 %v323
      %v451 = vunpack.c.h.b16 %v323
      %v452 = vunpack.c.l.b16 %v324
      %v453 = vunpack.c.h.b16 %v324
      %v454 = vunpack.c.l.b16 %v325
      %v455 = vunpack.c.h.b16 %v325
      %v456 = vunpack.c.l.b16 %v326
      %v457 = vunpack.c.h.b16 %v326
      %v458 = vunpack.c.l.b16 %v327
      %v459 = vunpack.c.h.b16 %v327
      %v460 = vunpack.c.l.b16 %v328
      %v461 = vunpack.c.h.b16 %v328
      %v462 = vunpack.c.l.b16 %v329
      %v463 = vunpack.c.h.b16 %v329
      %v464 = vunpack.c.l.b16 %v330
      %v465 = vunpack.c.h.b16 %v330
      %v466 = vunpack.c.l.b16 %v331
      %v467 = vunpack.c.h.b16 %v331
      %v468 = vunpack.c.l.b16 %v332
      %v469 = vunpack.c.h.b16 %v332
      %v470 = vunpack.c.l.b16 %v333
      %v471 = vunpack.c.h.b16 %v333
      %v472 = vunpack.c.l.b16 %v334
      %v473 = vunpack.c.h.b16 %v334
      %v474 = vunpack.c.l.b16 %v335
      %v475 = vunpack.c.h.b16 %v335
      %v476 = vunpack.c.l.b16 %v336
      %v477 = vunpack.c.h.b16 %v336
      %v478 = vunpack.c.l.b16 %v337
      %v479 = vunpack.c.h.b16 %v337
      %v480 = vunpack.c.l.b16 %v338
      %v481 = vunpack.c.h.b16 %v338
      %v482 = vunpack.c.l.b16 %v339
      %v483 = vunpack.c.h.b16 %v339
      %v484 = vunpack.c.l.b16 %v340
      %v485 = vunpack.c.h.b16 %v340
      %v486 = vunpack.c.l.b16 %v341
      %v487 = vunpack.c.h.b16 %v341
      %v488 = vunpack.c.l.b16 %v342
      %v489 = vunpack.c.h.b16 %v342
      %v490 = vunpack.c.l.b16 %v343
      %v491 = vunpack.c.h.b16 %v343
      %v492 = vunpack.c.l.b16 %v344
      %v493 = vunpack.c.h.b16 %v344
      %v494 = vunpack.c.l.b16 %v345
      %v495 = vunpack.c.h.b16 %v345
      %v496 = vunpack.c.l.b16 %v346
      %v497 = vunpack.c.h.b16 %v346
      %v498 = vunpack.c.l.b16 %v347
      %v499 = vunpack.c.h.b16 %v347
      %v500 = vunpack.c.l.b16 %v348
      %v501 = vunpack.c.h.b16 %v348
      %v502 = vunpack.c.l.b16 %v349
      %v503 = vunpack.c.h.b16 %v349
      %v504 = vpack.c.b16 %v436, %v432
      %v505 = vpack.c.b16 %v437, %v433
      %v506 = vpack.c.b16 %v438, %v434
      %v507 = vpack.c.b16 %v439, %v435
      %v508 = vpack.c.b16 %v444, %v440
      %v509 = vpack.c.b16 %v445, %v441
      %v510 = vpack.c.b16 %v446, %v442
      %v511 = vpack.c.b16 %v447, %v443
      %v512 = vpack.c.b16 %v452, %v448
      %v513 = vpack.c.b16 %v453, %v449
      %v514 = vpack.c.b16 %v454, %v450
      %v515 = vpack.c.b16 %v455, %v451
      %v516 = vpack.c.b16 %v460, %v456
      %v517 = vpack.c.b16 %v461, %v457
      %v518 = vpack.c.b16 %v462, %v458
      %v519 = vpack.c.b16 %v463, %v459
      %v520 = vpack.c.b16 %v468, %v464
      %v521 = vpack.c.b16 %v469, %v465
      %v522 = vpack.c.b16 %v470, %v466
      %v523 = vpack.c.b16 %v471, %v467
      %v524 = vpack.c.b16 %v476, %v472
      %v525 = vpack.c.b16 %v477, %v473
      %v526 = vpack.c.b16 %v478, %v474
      %v527 = vpack.c.b16 %v479, %v475
      %v528 = vpack.c.b16 %v484, %v480
      %v529 = vpack.c.b16 %v485, %v481
      %v530 = vpack.c.b16 %v486, %v482
      %v531 = vpack.c.b16 %v487, %v483
      %v532 = vpack.c.b16 %v492, %v488
      %v533 = vpack.c.b16 %v493, %v489
      %v534 = vpack.c.b16 %v494, %v490
      %v535 = vpack.c.b16 %v495, %v491
      %v536 = vpack.c.b16 %v500, %v496
      %v537 = vpack.c.b16 %v501, %v497
      %v538 = vpack.c.b16 %v502, %v498
      %v539 = vpack.c.b16 %v503, %v499
      %vm576 = vcmask 130048
      %v578 = vsel %vm576, %v391, 0
      %v581 = vsel %vm576, %v393, 0
      %583 = vmatprep.subr.bf16.mxu0 %v505
      %584 = vmatpush1.bf16.msra.mxu0 %v504
      %585 = vmatprep.subr.bf16.mxu0 %v509
      %586 = vmatpush1.bf16.msra.mxu0 %v508
      %587 = vmatprep.subr.bf16.mxu0 %v513
      %588 = vmatpush1.bf16.msra.mxu0 %v512
      %589 = vmatprep.subr.bf16.mxu0 %v517
      %590 = vmatpush1.bf16.msra.mxu0 %v516
      %591 = vmatprep.subr.bf16.mxu0 %v521
      %592 = vmatpush1.bf16.msra.mxu0 %v520
      %593 = vmatprep.subr.bf16.mxu0 %v525
      %594 = vmatpush1.bf16.msra.mxu0 %v524
      %595 = vmatprep.subr.bf16.mxu0 %v529
      %596 = vmatpush1.bf16.msra.mxu0 %v528
      %597 = vmatprep.subr.bf16.mxu0 %v533
      %598 = vmatpush1.bf16.msra.mxu0 %v532
      %599 = vmatprep.subr.bf16.mxu0 %v537
      %600 = vmatpush1.bf16.msra.mxu0 %v536
      %601 = vmatprep.subr.bf16.mxu0 0
      %602 = vmatpush1.bf16.msra.mxu0 0
      %603 = vmatprep.subr.bf16.mxu0 0
      %604 = vmatpush1.bf16.msra.mxu0 0
      %605 = vmatprep.subr.bf16.mxu0 0
      %606 = vmatpush1.bf16.msra.mxu0 0
      %607 = vmatprep.subr.bf16.mxu0 0
      %608 = vmatpush1.bf16.msra.mxu0 0
      %609 = vmatprep.subr.bf16.mxu0 0
      %610 = vmatpush1.bf16.msra.mxu0 0
      %611 = vmatprep.subr.bf16.mxu0 0
      %612 = vmatpush1.bf16.msra.mxu0 0
      %613 = vmatprep.subr.bf16.mxu0 0
      %614 = vmatpush1.bf16.msra.mxu0 0
      %615 = vmatprep.mubr.bf16.mxu0 %v578
      %616 = vmatmul.mubr.bf16.gmra.mrb[0].mxu0 %v390
      %v617 = vpop.f32.mrb[0].mxu0
      %v618 = vadd.f32 %v361, %v617
      %v619 = vpop.f32.mrb[0].mxu0
      %v620 = vadd.f32 %v361, %v619
      %v621 = vpop.f32.mrb[0].mxu0
      %v622 = vadd.f32 %v366, %v621
      %v623 = vpop.f32.mrb[0].mxu0
      %v624 = vadd.f32 %v366, %v623
      %625 = vmatprep.mubr.bf16.mxu0 %v581
      %626 = vmatmul.mubr.bf16.gmra.mrb[0].mxu0 %v392
      %v627 = vpop.f32.mrb[0].mxu0
      %v628 = vadd.f32 %v371, %v627
      %v629 = vpop.f32.mrb[0].mxu0
      %v630 = vadd.f32 %v371, %v629
      %v631 = vpop.f32.mrb[0].mxu0
      %v632 = vadd.f32 %v376, %v631
      %v633 = vpop.f32.mrb[0].mxu0
      %v634 = vadd.f32 %v376, %v633
      %635 = vdwg.mxu0
      %636 = vmatprep.subr.bf16.mxu0 %v507
      %637 = vmatpush1.bf16.msra.mxu0 %v506
      %638 = vmatprep.subr.bf16.mxu0 %v511
      %639 = vmatpush1.bf16.msra.mxu0 %v510
      %640 = vmatprep.subr.bf16.mxu0 %v515
      %641 = vmatpush1.bf16.msra.mxu0 %v514
      %642 = vmatprep.subr.bf16.mxu0 %v519
      %643 = vmatpush1.bf16.msra.mxu0 %v518
      %644 = vmatprep.subr.bf16.mxu0 %v523
      %645 = vmatpush1.bf16.msra.mxu0 %v522
      %646 = vmatprep.subr.bf16.mxu0 %v527
      %647 = vmatpush1.bf16.msra.mxu0 %v526
      %648 = vmatprep.subr.bf16.mxu0 %v531
      %649 = vmatpush1.bf16.msra.mxu0 %v530
      %650 = vmatprep.subr.bf16.mxu0 %v535
      %651 = vmatpush1.bf16.msra.mxu0 %v534
      %652 = vmatprep.subr.bf16.mxu0 %v539
      %653 = vmatpush1.bf16.msra.mxu0 %v538
      %654 = vmatprep.subr.bf16.mxu0 0
      %655 = vmatpush1.bf16.msra.mxu0 0
      %656 = vmatprep.subr.bf16.mxu0 0
      %657 = vmatpush1.bf16.msra.mxu0 0
      %658 = vmatprep.subr.bf16.mxu0 0
      %659 = vmatpush1.bf16.msra.mxu0 0
      %660 = vmatprep.subr.bf16.mxu0 0
      %661 = vmatpush1.bf16.msra.mxu0 0
      %662 = vmatprep.subr.bf16.mxu0 0
      %663 = vmatpush1.bf16.msra.mxu0 0
      %664 = vmatprep.subr.bf16.mxu0 0
      %665 = vmatpush1.bf16.msra.mxu0 0
      %666 = vmatprep.subr.bf16.mxu0 0
      %667 = vmatpush1.bf16.msra.mxu0 0
      %668 = vmatprep.mubr.bf16.mxu0 %v578
      %669 = vmatmul.mubr.bf16.gmra.mrb[0].mxu0 %v390
      %v670 = vpop.f32.mrb[0].mxu0
      %v671 = vadd.f32 %v361, %v670
      %v672 = vpop.f32.mrb[0].mxu0
      %v673 = vadd.f32 %v361, %v672
      %v674 = vpop.f32.mrb[0].mxu0
      %v675 = vadd.f32 %v366, %v674
      %v676 = vpop.f32.mrb[0].mxu0
      %v677 = vadd.f32 %v366, %v676
      %678 = vmatprep.mubr.bf16.mxu0 %v581
      %679 = vmatmul.mubr.bf16.gmra.mrb[0].mxu0 %v392
      %v680 = vpop.f32.mrb[0].mxu0
      %v681 = vadd.f32 %v371, %v680
      %v682 = vpop.f32.mrb[0].mxu0
      %v683 = vadd.f32 %v371, %v682
      %v684 = vpop.f32.mrb[0].mxu0
      %v685 = vadd.f32 %v376, %v684
      %v686 = vpop.f32.mrb[0].mxu0
      %v687 = vadd.f32 %v376, %v686
      %688 = vdwg.mxu0
      %v689 = vlaneseq
      %v690 = vand.u32 %v689, 127
      %v691 = vadd.s32 %v690, 128
      %v692 = vadd.s32 %v690, 256
      %v693 = vadd.s32 %v690, 384
      %s694 = scvt.s32.f32 %s313
      %vm695 = vcmp.ge.s32.totalorder %v690, 0
      %vm696 = vcmp.ge.s32.totalorder %v691, 0
      %vm697 = vcmp.ge.s32.totalorder %v692, 0
      %vm698 = vcmp.ge.s32.totalorder %v693, 0
      %v699 = vstv %s313
      %vm700 = vcmp.lt.s32.totalorder %v690, %v699
      %vm701 = vcmp.lt.s32.totalorder %v691, %v699
      %vm702 = vcmp.lt.s32.totalorder %v692, %v699
      %vm703 = vcmp.lt.s32.totalorder %v693, %v699
      %vm704 = vmand %vm695, %vm700
      %vm705 = vmand %vm696, %vm701
      %vm706 = vmand %vm697, %vm702
      %vm707 = vmand %vm698, %vm703
      %v708 = vsel %vm704, %v618, 0.0
      %v709 = vsel %vm705, %v620, 0.0
      %v710 = vsel %vm706, %v671, 0.0
      %v711 = vsel %vm707, %v673, 0.0
      %v712 = vsel %vm704, %v622, 0.0
      %v713 = vsel %vm705, %v624, 0.0
      %v714 = vsel %vm706, %v675, 0.0
      %v715 = vsel %vm707, %v677, 0.0
      %v716 = vsel %vm704, %v628, 0.0
      %v717 = vsel %vm705, %v630, 0.0
      %v718 = vsel %vm706, %v681, 0.0
      %v719 = vsel %vm707, %v683, 0.0
      %v720 = vsel %vm704, %v632, 0.0
      %v721 = vsel %vm705, %v634, 0.0
      %v722 = vsel %vm706, %v685, 0.0
      %v723 = vsel %vm707, %v687, 0.0
      %v724 = vadd.f32 %v708, %v709
      %v725 = vadd.f32 %v724, %v710
      %v726 = vadd.f32 %v725, %v711
      %727 = vadd.xlane.f32.xlu0 %v726
      %v728 = vpop.xlane.xlu0 %727
      %v729 = vadd.f32 %v712, %v713
      %v730 = vadd.f32 %v729, %v714
      %v731 = vadd.f32 %v730, %v715
      %732 = vadd.xlane.f32.xlu0 %v731
      %v733 = vpop.xlane.xlu0 %732
      %v734 = vadd.f32 %v716, %v717
      %v735 = vadd.f32 %v734, %v718
      %v736 = vadd.f32 %v735, %v719
      %737 = vadd.xlane.f32.xlu0 %v736
      %v738 = vpop.xlane.xlu0 %737
      %v739 = vadd.f32 %v720, %v721
      %v740 = vadd.f32 %v739, %v722
      %v741 = vadd.f32 %v740, %v723
      %742 = vadd.xlane.f32.xlu0 %v741
      %v743 = vpop.xlane.xlu0 %742
      %v744 = vstv %s694
      %v745 = vrcp.pop %v744
      %v746 = vmul.f32 %v728, %v745
      %v747 = vmul.f32 %v733, %v745
      %v748 = vmul.f32 %v738, %v745
      %v749 = vmul.f32 %v743, %v745
      %v750 = vsub.f32 %v618, %v746
      %v751 = vsub.f32 %v620, %v746
      %v752 = vsub.f32 %v671, %v746
      %v753 = vsub.f32 %v673, %v746
      %v754 = vsub.f32 %v622, %v747
      %v755 = vsub.f32 %v624, %v747
      %v756 = vsub.f32 %v675, %v747
      %v757 = vsub.f32 %v677, %v747
      %v758 = vsub.f32 %v628, %v748
      %v759 = vsub.f32 %v630, %v748
      %v760 = vsub.f32 %v681, %v748
      %v761 = vsub.f32 %v683, %v748
      %v762 = vsub.f32 %v632, %v749
      %v763 = vsub.f32 %v634, %v749
      %v764 = vsub.f32 %v685, %v749
      %v765 = vsub.f32 %v687, %v749
      %v766 = vsel %vm704, %v750, 0.0
      %v767 = vsel %vm705, %v751, 0.0
      %v768 = vsel %vm706, %v752, 0.0
      %v769 = vsel %vm707, %v753, 0.0
      %v770 = vsel %vm704, %v754, 0.0
      %v771 = vsel %vm705, %v755, 0.0
      %v772 = vsel %vm706, %v756, 0.0
      %v773 = vsel %vm707, %v757, 0.0
      %v774 = vsel %vm704, %v758, 0.0
      %v775 = vsel %vm705, %v759, 0.0
      %v776 = vsel %vm706, %v760, 0.0
      %v777 = vsel %vm707, %v761, 0.0
      %v778 = vsel %vm704, %v762, 0.0
      %v779 = vsel %vm705, %v763, 0.0
      %v780 = vsel %vm706, %v764, 0.0
      %v781 = vsel %vm707, %v765, 0.0
      %v782 = vmul.f32 %v766, %v766
      %v783 = vmul.f32 %v767, %v767
      %v784 = vmul.f32 %v768, %v768
      %v785 = vmul.f32 %v769, %v769
      %v786 = vmul.f32 %v770, %v770
      %v787 = vmul.f32 %v771, %v771
      %v788 = vmul.f32 %v772, %v772
      %v789 = vmul.f32 %v773, %v773
      %v790 = vmul.f32 %v774, %v774
      %v791 = vmul.f32 %v775, %v775
      %v792 = vmul.f32 %v776, %v776
      %v793 = vmul.f32 %v777, %v777
      %v794 = vmul.f32 %v778, %v778
      %v795 = vmul.f32 %v779, %v779
      %v796 = vmul.f32 %v780, %v780
      %v797 = vmul.f32 %v781, %v781
      %v798 = vadd.f32 %v782, %v783
      %v799 = vadd.f32 %v798, %v784
      %v800 = vadd.f32 %v799, %v785
      %801 = vadd.xlane.f32.xlu0 %v800
      %v802 = vpop.xlane.xlu0 %801
      %v803 = vadd.f32 %v786, %v787
      %v804 = vadd.f32 %v803, %v788
      %v805 = vadd.f32 %v804, %v789
      %806 = vadd.xlane.f32.xlu0 %v805
      %v807 = vpop.xlane.xlu0 %806
      %v808 = vadd.f32 %v790, %v791
      %v809 = vadd.f32 %v808, %v792
      %v810 = vadd.f32 %v809, %v793
      %811 = vadd.xlane.f32.xlu0 %v810
      %v812 = vpop.xlane.xlu0 %811
      %v813 = vadd.f32 %v794, %v795
      %v814 = vadd.f32 %v813, %v796
      %v815 = vadd.f32 %v814, %v797
      %816 = vadd.xlane.f32.xlu0 %v815
      %v817 = vpop.xlane.xlu0 %816
      %v818 = vmul.f32 %v802, %v745
      %v819 = vmul.f32 %v807, %v745
      %v820 = vmul.f32 %v812, %v745
      %v821 = vmul.f32 %v817, %v745
      %v822 = vmax.f32 %v818, 0.0
      %v823 = vmax.f32 %v819, 0.0
      %v824 = vmax.f32 %v820, 0.0
      %v825 = vmax.f32 %v821, 0.0
      %v826 = vadd.f32 %v822, 1e-05
      %v827 = vadd.f32 %v823, 1e-05
      %v828 = vadd.f32 %v824, 1e-05
      %v829 = vadd.f32 %v825, 1e-05
      %v830 = vrsqrt.pop %v826
      %v831 = vrsqrt.pop %v827
      %v832 = vrsqrt.pop %v828
      %v833 = vrsqrt.pop %v829
      %v834 = vmul.f32 %v750, %v830
      %v835 = vmul.f32 %v751, %v830
      %v836 = vmul.f32 %v752, %v830
      %v837 = vmul.f32 %v753, %v830
      %v838 = vmul.f32 %v754, %v831
      %v839 = vmul.f32 %v755, %v831
      %v840 = vmul.f32 %v756, %v831
      %v841 = vmul.f32 %v757, %v831
      %v842 = vmul.f32 %v758, %v832
      %v843 = vmul.f32 %v759, %v832
      %v844 = vmul.f32 %v760, %v832
      %v845 = vmul.f32 %v761, %v832
      %v846 = vmul.f32 %v762, %v833
      %v847 = vmul.f32 %v763, %v833
      %v848 = vmul.f32 %v764, %v833
      %v849 = vmul.f32 %v765, %v833
      %v850 = vsel %vm704, %v834, 0.0
      %v851 = vsel %vm705, %v835, 0.0
      %v852 = vsel %vm706, %v836, 0.0
      %v853 = vsel %vm707, %v837, 0.0
      %v854 = vsel %vm704, %v838, 0.0
      %v855 = vsel %vm705, %v839, 0.0
      %v856 = vsel %vm706, %v840, 0.0
      %v857 = vsel %vm707, %v841, 0.0
      %v858 = vsel %vm704, %v842, 0.0
      %v859 = vsel %vm705, %v843, 0.0
      %v860 = vsel %vm706, %v844, 0.0
      %v861 = vsel %vm707, %v845, 0.0
      %v862 = vsel %vm704, %v846, 0.0
      %v863 = vsel %vm705, %v847, 0.0
      %v864 = vsel %vm706, %v848, 0.0
      %v865 = vsel %vm707, %v849, 0.0
      %vm866 = vcmp.ge.s32.totalorder %v690, 256
      %vm867 = vcmp.ge.s32.totalorder %v691, 256
      %vm868 = vcmp.ge.s32.totalorder %v692, 256
      %vm869 = vcmp.ge.s32.totalorder %v693, 256
      %s870 = sadd.s32 %s313, 256
      %v871 = vstv %s870
      %vm872 = vcmp.lt.s32.totalorder %v690, %v871
      %vm873 = vcmp.lt.s32.totalorder %v691, %v871
      %vm874 = vcmp.lt.s32.totalorder %v692, %v871
      %vm875 = vcmp.lt.s32.totalorder %v693, %v871
      %vm876 = vmand %vm866, %vm872
      %vm877 = vmand %vm867, %vm873
      %vm878 = vmand %vm868, %vm874
      %vm879 = vmand %vm869, %vm875
      %v880 = vsel %vm876, %v618, 0.0
      %v881 = vsel %vm877, %v620, 0.0
      %v882 = vsel %vm878, %v671, 0.0
      %v883 = vsel %vm879, %v673, 0.0
      %v884 = vsel %vm876, %v622, 0.0
      %v885 = vsel %vm877, %v624, 0.0
      %v886 = vsel %vm878, %v675, 0.0
      %v887 = vsel %vm879, %v677, 0.0
      %v888 = vsel %vm876, %v628, 0.0
      %v889 = vsel %vm877, %v630, 0.0
      %v890 = vsel %vm878, %v681, 0.0
      %v891 = vsel %vm879, %v683, 0.0
      %v892 = vsel %vm876, %v632, 0.0
      %v893 = vsel %vm877, %v634, 0.0
      %v894 = vsel %vm878, %v685, 0.0
      %v895 = vsel %vm879, %v687, 0.0
      %v896 = vadd.f32 %v880, %v881
      %v897 = vadd.f32 %v896, %v882
      %v898 = vadd.f32 %v897, %v883
      %899 = vadd.xlane.f32.xlu0 %v898
      %v900 = vpop.xlane.xlu0 %899
      %v901 = vadd.f32 %v884, %v885
      %v902 = vadd.f32 %v901, %v886
      %v903 = vadd.f32 %v902, %v887
      %904 = vadd.xlane.f32.xlu0 %v903
      %v905 = vpop.xlane.xlu0 %904
      %v906 = vadd.f32 %v888, %v889
      %v907 = vadd.f32 %v906, %v890
      %v908 = vadd.f32 %v907, %v891
      %909 = vadd.xlane.f32.xlu0 %v908
      %v910 = vpop.xlane.xlu0 %909
      %v911 = vadd.f32 %v892, %v893
      %v912 = vadd.f32 %v911, %v894
      %v913 = vadd.f32 %v912, %v895
      %914 = vadd.xlane.f32.xlu0 %v913
      %v915 = vpop.xlane.xlu0 %914
      %v916 = vmul.f32 %v900, %v745
      %v917 = vmul.f32 %v905, %v745
      %v918 = vmul.f32 %v910, %v745
      %v919 = vmul.f32 %v915, %v745
      %v920 = vsub.f32 %v618, %v916
      %v921 = vsub.f32 %v620, %v916
      %v922 = vsub.f32 %v671, %v916
      %v923 = vsub.f32 %v673, %v916
      %v924 = vsub.f32 %v622, %v917
      %v925 = vsub.f32 %v624, %v917
      %v926 = vsub.f32 %v675, %v917
      %v927 = vsub.f32 %v677, %v917
      %v928 = vsub.f32 %v628, %v918
      %v929 = vsub.f32 %v630, %v918
      %v930 = vsub.f32 %v681, %v918
      %v931 = vsub.f32 %v683, %v918
      %v932 = vsub.f32 %v632, %v919
      %v933 = vsub.f32 %v634, %v919
      %v934 = vsub.f32 %v685, %v919
      %v935 = vsub.f32 %v687, %v919
      %v936 = vsel %vm876, %v920, 0.0
      %v937 = vsel %vm877, %v921, 0.0
      %v938 = vsel %vm878, %v922, 0.0
      %v939 = vsel %vm879, %v923, 0.0
      %v940 = vsel %vm876, %v924, 0.0
      %v941 = vsel %vm877, %v925, 0.0
      %v942 = vsel %vm878, %v926, 0.0
      %v943 = vsel %vm879, %v927, 0.0
      %v944 = vsel %vm876, %v928, 0.0
      %v945 = vsel %vm877, %v929, 0.0
      %v946 = vsel %vm878, %v930, 0.0
      %v947 = vsel %vm879, %v931, 0.0
      %v948 = vsel %vm876, %v932, 0.0
      %v949 = vsel %vm877, %v933, 0.0
      %v950 = vsel %vm878, %v934, 0.0
      %v951 = vsel %vm879, %v935, 0.0
      %v952 = vmul.f32 %v936, %v936
      %v953 = vmul.f32 %v937, %v937
      %v954 = vmul.f32 %v938, %v938
      %v955 = vmul.f32 %v939, %v939
      %v956 = vmul.f32 %v940, %v940
      %v957 = vmul.f32 %v941, %v941
      %v958 = vmul.f32 %v942, %v942
      %v959 = vmul.f32 %v943, %v943
      %v960 = vmul.f32 %v944, %v944
      %v961 = vmul.f32 %v945, %v945
      %v962 = vmul.f32 %v946, %v946
      %v963 = vmul.f32 %v947, %v947
      %v964 = vmul.f32 %v948, %v948
      %v965 = vmul.f32 %v949, %v949
      %v966 = vmul.f32 %v950, %v950
      %v967 = vmul.f32 %v951, %v951
      %v968 = vadd.f32 %v952, %v953
      %v969 = vadd.f32 %v968, %v954
      %v970 = vadd.f32 %v969, %v955
      %971 = vadd.xlane.f32.xlu0 %v970
      %v972 = vpop.xlane.xlu0 %971
      %v973 = vadd.f32 %v956, %v957
      %v974 = vadd.f32 %v973, %v958
      %v975 = vadd.f32 %v974, %v959
      %976 = vadd.xlane.f32.xlu0 %v975
      %v977 = vpop.xlane.xlu0 %976
      %v978 = vadd.f32 %v960, %v961
      %v979 = vadd.f32 %v978, %v962
      %v980 = vadd.f32 %v979, %v963
      %981 = vadd.xlane.f32.xlu0 %v980
      %v982 = vpop.xlane.xlu0 %981
      %v983 = vadd.f32 %v964, %v965
      %v984 = vadd.f32 %v983, %v966
      %v985 = vadd.f32 %v984, %v967
      %986 = vadd.xlane.f32.xlu0 %v985
      %v987 = vpop.xlane.xlu0 %986
      %v988 = vmul.f32 %v972, %v745
      %v989 = vmul.f32 %v977, %v745
      %v990 = vmul.f32 %v982, %v745
      %v991 = vmul.f32 %v987, %v745
      %v992 = vmax.f32 %v988, 0.0
      %v993 = vmax.f32 %v989, 0.0
      %v994 = vmax.f32 %v990, 0.0
      %v995 = vmax.f32 %v991, 0.0
      %v996 = vadd.f32 %v992, 1e-05
      %v997 = vadd.f32 %v993, 1e-05
      %v998 = vadd.f32 %v994, 1e-05
      %v999 = vadd.f32 %v995, 1e-05
      %v1000 = vrsqrt.pop %v996
      %v1001 = vrsqrt.pop %v997
      %v1002 = vrsqrt.pop %v998
      %v1003 = vrsqrt.pop %v999
      %v1004 = vmul.f32 %v920, %v1000
      %v1005 = vmul.f32 %v921, %v1000
      %v1006 = vmul.f32 %v922, %v1000
      %v1007 = vmul.f32 %v923, %v1000
      %v1008 = vmul.f32 %v924, %v1001
      %v1009 = vmul.f32 %v925, %v1001
      %v1010 = vmul.f32 %v926, %v1001
      %v1011 = vmul.f32 %v927, %v1001
      %v1012 = vmul.f32 %v928, %v1002
      %v1013 = vmul.f32 %v929, %v1002
      %v1014 = vmul.f32 %v930, %v1002
      %v1015 = vmul.f32 %v931, %v1002
      %v1016 = vmul.f32 %v932, %v1003
      %v1017 = vmul.f32 %v933, %v1003
      %v1018 = vmul.f32 %v934, %v1003
      %v1019 = vmul.f32 %v935, %v1003
      %v1020 = vsel %vm876, %v1004, %v850
      %v1021 = vsel %vm877, %v1005, %v851
      %v1022 = vsel %vm878, %v1006, %v852
      %v1023 = vsel %vm879, %v1007, %v853
      %v1024 = vsel %vm876, %v1008, %v854
      %v1025 = vsel %vm877, %v1009, %v855
      %v1026 = vsel %vm878, %v1010, %v856
      %v1027 = vsel %vm879, %v1011, %v857
      %v1028 = vsel %vm876, %v1012, %v858
      %v1029 = vsel %vm877, %v1013, %v859
      %v1030 = vsel %vm878, %v1014, %v860
      %v1031 = vsel %vm879, %v1015, %v861
      %v1032 = vsel %vm876, %v1016, %v862
      %v1033 = vsel %vm877, %v1017, %v863
      %v1034 = vsel %vm878, %v1018, %v864
      %v1035 = vsel %vm879, %v1019, %v865
      %v1036 = vld [vmem:[%s301] sm:$0xff]
      %v1037 = vld [vmem:[%s301 + $0x8] sm:$0xff]
      %v1038 = vld [vmem:[%s301 + $0x10] sm:$0xff]
      %v1039 = vld [vmem:[%s301 + $0x18] sm:$0xff]
      %1041 = vset.pattern.permute.xlu0 0
      %1042 = vperm.xlu0 %1041, %v1036
      %v1043 = vpop.permute.xlu0 %1042
      %1046 = vset.pattern.permute.xlu0 0
      %1047 = vperm.xlu0 %1046, %v1037
      %v1048 = vpop.permute.xlu0 %1047
      %1051 = vset.pattern.permute.xlu0 0
      %1052 = vperm.xlu0 %1051, %v1038
      %v1053 = vpop.permute.xlu0 %1052
      %1056 = vset.pattern.permute.xlu0 0
      %1057 = vperm.xlu0 %1056, %v1039
      %v1058 = vpop.permute.xlu0 %1057
      %v1060 = vmul.f32 %v1020, %v1043
      %v1061 = vmul.f32 %v1021, %v1043
      %v1062 = vmul.f32 %v1022, %v1043
      %v1063 = vmul.f32 %v1023, %v1043
      %v1064 = vmul.f32 %v1024, %v1048
      %v1065 = vmul.f32 %v1025, %v1048
      %v1066 = vmul.f32 %v1026, %v1048
      %v1067 = vmul.f32 %v1027, %v1048
      %v1068 = vmul.f32 %v1028, %v1053
      %v1069 = vmul.f32 %v1029, %v1053
      %v1070 = vmul.f32 %v1030, %v1053
      %v1071 = vmul.f32 %v1031, %v1053
      %v1072 = vmul.f32 %v1032, %v1058
      %v1073 = vmul.f32 %v1033, %v1058
      %v1074 = vmul.f32 %v1034, %v1058
      %v1075 = vmul.f32 %v1035, %v1058
      %v1076 = vld [vmem:[%s306] sm:$0xff]
      %v1077 = vld [vmem:[%s306 + $0x8] sm:$0xff]
      %v1078 = vld [vmem:[%s306 + $0x10] sm:$0xff]
      %v1079 = vld [vmem:[%s306 + $0x18] sm:$0xff]
      %1081 = vset.pattern.permute.xlu0 0
      %1082 = vperm.xlu0 %1081, %v1076
      %v1083 = vpop.permute.xlu0 %1082
      %1086 = vset.pattern.permute.xlu0 0
      %1087 = vperm.xlu0 %1086, %v1077
      %v1088 = vpop.permute.xlu0 %1087
      %1091 = vset.pattern.permute.xlu0 0
      %1092 = vperm.xlu0 %1091, %v1078
      %v1093 = vpop.permute.xlu0 %1092
      %1096 = vset.pattern.permute.xlu0 0
      %1097 = vperm.xlu0 %1096, %v1079
      %v1098 = vpop.permute.xlu0 %1097
      %v1100 = vadd.f32 %v1060, %v1083
      %v1101 = vadd.f32 %v1061, %v1083
      %v1102 = vadd.f32 %v1062, %v1083
      %v1103 = vadd.f32 %v1063, %v1083
      %v1104 = vadd.f32 %v1064, %v1088
      %v1105 = vadd.f32 %v1065, %v1088
      %v1106 = vadd.f32 %v1066, %v1088
      %v1107 = vadd.f32 %v1067, %v1088
      %v1108 = vadd.f32 %v1068, %v1093
      %v1109 = vadd.f32 %v1069, %v1093
      %v1110 = vadd.f32 %v1070, %v1093
      %v1111 = vadd.f32 %v1071, %v1093
      %v1112 = vadd.f32 %v1072, %v1098
      %v1113 = vadd.f32 %v1073, %v1098
      %v1114 = vadd.f32 %v1074, %v1098
      %v1115 = vadd.f32 %v1075, %v1098
      %1116 = vst [vmem:[%s311] sm:$0xff] %v1100
      %1117 = vst [vmem:[%s311 + $0x8] sm:$0xff] %v1101
      %1118 = vst [vmem:[%s311 + $0x10] sm:$0xff] %v1102
      %1119 = vst [vmem:[%s311 + $0x18] sm:$0xff] %v1103
      %1120 = vst [vmem:[%s311 + $0x20] sm:$0xff] %v1104
      %1121 = vst [vmem:[%s311 + $0x28] sm:$0xff] %v1105
      %1122 = vst [vmem:[%s311 + $0x30] sm:$0xff] %v1106
      %1123 = vst [vmem:[%s311 + $0x38] sm:$0xff] %v1107
      %1124 = vst [vmem:[%s311 + $0x40] sm:$0xff] %v1108
      %1125 = vst [vmem:[%s311 + $0x48] sm:$0xff] %v1109
      %1126 = vst [vmem:[%s311 + $0x50] sm:$0xff] %v1110
      %1127 = vst [vmem:[%s311 + $0x58] sm:$0xff] %v1111
      %1128 = vst [vmem:[%s311 + $0x60] sm:$0xff] %v1112
      %1129 = vst [vmem:[%s311 + $0x68] sm:$0xff] %v1113
      %1130 = vst [vmem:[%s311 + $0x70] sm:$0xff] %v1114
      %1131 = vst [vmem:[%s311 + $0x78] sm:$0xff] %v1115
      %p1132 = scmp.lt.s32.totalorder %s23, 2
      %s1133 = scalar_select %p1132, %s23, 2
      %s1134 = smul.addr %s1133, 16
      %s1135 = smul.addr %s1134, 8
      %s1136 = scalar_lea.vmem %s6, %s1135
      // Predicated region
      $region41: #{deformable_detr_forward.2} parent=39 // pred_check
        %p1137 = pneg %p171
      $region42: #{deformable_detr_forward.2} parent=39 // pred_check_branch
        %1139 = sbr.rel (%p1137) target = $region44
      $region43: #{deformable_detr_forward.2} parent=39 // pred_region
        _
      $region44: #{deformable_detr_forward.2} parent=39 // pred_fallthru
        _
    $region40: #{deformable_detr_forward.2} parent=5 // pred_fallthru
      _
    %p1140 = scmp.le.s32.totalorder 2, %s18
    // Predicated region
    $region45: #{deformable_detr_forward.2} parent=5 // pred_check
      %p1141 = pneg %p1140
    $region46: #{deformable_detr_forward.2} parent=5 // pred_check_branch
      %1143 = sbr.rel (%p1141) target = $region48
    $region47: #{deformable_detr_forward.2} parent=5 // pred_region
      %s1144 = ssub.s32 %s18, 2
      // Predicated region
      $region49: #{deformable_detr_forward.2} parent=47 // pred_check
        %p1145 = pneg %p177
      $region50: #{deformable_detr_forward.2} parent=47 // pred_check_branch
        %1147 = sbr.rel (%p1145) target = $region52
      $region51: #{deformable_detr_forward.2} parent=47 // pred_region
        %p1148 = scmp.lt.s32.totalorder %s24, 2
        %s1149 = scalar_select %p1148, %s24, 2
        %s1150 = smul.addr %s1149, 16
        %s1151 = smul.addr %s1150, 8
        %s1152 = scalar_lea.vmem %s6, %s1151
      $region52: #{deformable_detr_forward.2} parent=47 // pred_fallthru
        _
    $region48: #{deformable_detr_forward.2} parent=5 // pred_fallthru
      _
  $region6: #{deformable_detr_forward.2} parent=0 // loop_footer
    %s22 = sadd.s32 1, %s18
  $region7: #{deformable_detr_forward.2} parent=0 // loop_footer_branch
    %17 = sbr.rel target = $region3
  $region8: #{deformable_detr_forward.2} parent=0 // loop_exit
    _

// kernel: deformable_detr_forward.3
$region0: #{deformable_detr_forward.3}
  #allocation0 [shape = 'u32[]', space=smem, size = 0x4, offset = 0x4, fixed_abs, tag = 'smem constant byte address 0x4 - core index']
  #allocation1 [shape = 'u32[144,128]{1,0:T(1,128)}', space=vmem, size = 0x12000, scoped, tag = 'internal scratch']
  %s0 = inlined_call_operand.vmem [shape: bf16[32,32], index: 0, kind: input, shape index: {}]
  %s1 = inlined_call_operand.vmem [shape: f32[32,2], index: 1, kind: input, shape index: {}]
  %s2 = inlined_call_operand.vmem [shape: bf16[32,48], index: 2, kind: input, shape index: {}]
  %s3 = inlined_call_operand.vmem [shape: f32[1,48], index: 3, kind: input, shape index: {}]
  %s4 = inlined_call_operand.vmem [shape: bf16[32,32], index: 4, kind: input, shape index: {}]
  %s5 = inlined_call_operand.vmem [shape: f32[1,32], index: 5, kind: input, shape index: {}]
  %s6 = inlined_call_operand.vmem [shape: bf16[32,4], index: 6, kind: input, shape index: {}]
  %s7 = inlined_call_operand.vmem [shape: f32[1,4], index: 7, kind: input, shape index: {}]
  %s8 = inlined_call_operand.vmem [shape: f32[32,128], index: 8, kind: output, shape index: {}]
  %s9 = sld [smem:[#allocation0]]
  $region42: #{deformable_detr_forward.3} parent=0
    _
  %s11 = ssub.s32 1, %s9
  %s12 = scalar_select 0, %s11, %s9
  // Predicated region
  $region2: #{deformable_detr_forward.3} parent=0 // pred_check
    _
  $region3: #{deformable_detr_forward.3} parent=0 // pred_check_branch
    %14 = sbr.rel (0) target = $region5
  $region4: #{deformable_detr_forward.3} parent=0 // pred_region
    _
  $region5: #{deformable_detr_forward.3} parent=0 // pred_fallthru
    _
  // Predicated region
  $region6: #{deformable_detr_forward.3} parent=0 // pred_check
    _
  $region7: #{deformable_detr_forward.3} parent=0 // pred_check_branch
    %16 = sbr.rel (0) target = $region9
  $region8: #{deformable_detr_forward.3} parent=0 // pred_region
    _
  $region9: #{deformable_detr_forward.3} parent=0 // pred_fallthru
    _
  // Predicated region
  $region10: #{deformable_detr_forward.3} parent=0 // pred_check
    _
  $region11: #{deformable_detr_forward.3} parent=0 // pred_check_branch
    %18 = sbr.rel (0) target = $region13
  $region12: #{deformable_detr_forward.3} parent=0 // pred_region
    _
  $region13: #{deformable_detr_forward.3} parent=0 // pred_fallthru
    _
  // Predicated region
  $region14: #{deformable_detr_forward.3} parent=0 // pred_check
    _
  $region15: #{deformable_detr_forward.3} parent=0 // pred_check_branch
    %20 = sbr.rel (0) target = $region17
  $region16: #{deformable_detr_forward.3} parent=0 // pred_region
    _
  $region17: #{deformable_detr_forward.3} parent=0 // pred_fallthru
    _
  // Predicated region
  $region18: #{deformable_detr_forward.3} parent=0 // pred_check
    _
  $region19: #{deformable_detr_forward.3} parent=0 // pred_check_branch
    %22 = sbr.rel (0) target = $region21
  $region20: #{deformable_detr_forward.3} parent=0 // pred_region
    _
  $region21: #{deformable_detr_forward.3} parent=0 // pred_fallthru
    _
  // Predicated region
  $region22: #{deformable_detr_forward.3} parent=0 // pred_check
    _
  $region23: #{deformable_detr_forward.3} parent=0 // pred_check_branch
    %24 = sbr.rel (0) target = $region25
  $region24: #{deformable_detr_forward.3} parent=0 // pred_region
    _
  $region25: #{deformable_detr_forward.3} parent=0 // pred_fallthru
    _
  // Predicated region
  $region26: #{deformable_detr_forward.3} parent=0 // pred_check
    _
  $region27: #{deformable_detr_forward.3} parent=0 // pred_check_branch
    %26 = sbr.rel (0) target = $region29
  $region28: #{deformable_detr_forward.3} parent=0 // pred_region
    _
  $region29: #{deformable_detr_forward.3} parent=0 // pred_fallthru
    _
  // Predicated region
  $region30: #{deformable_detr_forward.3} parent=0 // pred_check
    _
  $region31: #{deformable_detr_forward.3} parent=0 // pred_check_branch
    %28 = sbr.rel (0) target = $region33
  $region32: #{deformable_detr_forward.3} parent=0 // pred_region
    _
  $region33: #{deformable_detr_forward.3} parent=0 // pred_fallthru
    _
  %v30 = vld [vmem:[%s0] sm:$0xf]
  %v31 = vld [vmem:[%s0 + $0x4] sm:$0xf]
  %v32 = vld [vmem:[%s0 + $0x8] sm:$0xf]
  %v33 = vld [vmem:[%s0 + $0xc] sm:$0xf]
  %v34 = vld [vmem:[%s1] sm:$0xff]
  %v35 = vld [vmem:[%s1 + $0x8] sm:$0xff]
  %v36 = vld [vmem:[%s1 + $0x10] sm:$0xff]
  %v37 = vld [vmem:[%s1 + $0x18] sm:$0xff]
  %v38 = vmax.f32 %v34, 0.0
  %v39 = vmax.f32 %v35, 0.0
  %v40 = vmax.f32 %v36, 0.0
  %v41 = vmax.f32 %v37, 0.0
  %v42 = vmin.f32 %v38, 1.0
  %v43 = vmin.f32 %v39, 1.0
  %v44 = vmin.f32 %v40, 1.0
  %v45 = vmin.f32 %v41, 1.0
  %v46 = vmax.f32 %v42, 1e-05
  %v47 = vmax.f32 %v43, 1e-05
  %v48 = vmax.f32 %v44, 1e-05
  %v49 = vmax.f32 %v45, 1e-05
  %v50 = vlog2.pop %v46
  %v51 = vmul.f32 %v50, 0.6931472
  %v52 = vlog2.pop %v47
  %v53 = vmul.f32 %v52, 0.6931472
  %v54 = vlog2.pop %v48
  %v55 = vmul.f32 %v54, 0.6931472
  %v56 = vlog2.pop %v49
  %v57 = vmul.f32 %v56, 0.6931472
  %v58 = vsub.f32 1.0, %v42
  %v59 = vsub.f32 1.0, %v43
  %v60 = vsub.f32 1.0, %v44
  %v61 = vsub.f32 1.0, %v45
  %v62 = vmax.f32 %v58, 1e-05
  %v63 = vmax.f32 %v59, 1e-05
  %v64 = vmax.f32 %v60, 1e-05
  %v65 = vmax.f32 %v61, 1e-05
  %v66 = vlog2.pop %v62
  %v67 = vmul.f32 %v66, 0.6931472
  %v68 = vlog2.pop %v63
  %v69 = vmul.f32 %v68, 0.6931472
  %v70 = vlog2.pop %v64
  %v71 = vmul.f32 %v70, 0.6931472
  %v72 = vlog2.pop %v65
  %v73 = vmul.f32 %v72, 0.6931472
  %v74 = vsub.f32 %v51, %v67
  %v75 = vsub.f32 %v53, %v69
  %v76 = vsub.f32 %v55, %v71
  %v77 = vsub.f32 %v57, %v73
  %v78 = vld [vmem:[%s2] sm:$0xf]
  %v79 = vld [vmem:[%s2 + $0x4] sm:$0xf]
  %v80 = vld [vmem:[%s2 + $0x8] sm:$0xf]
  %v81 = vld [vmem:[%s2 + $0xc] sm:$0xf]
  %v82 = vld [vmem:[%s3] sm:$0x1]
  %v84 = vlaneseq
  %v85 = vshrl.u32 %v84, 7
  %v86 = vsub.s32 0, %v85
  %v87 = vrot.slane %v82, %v86
  %v93 = vunpack.c.l.b16 %v30
  %v94 = vunpack.c.l.b16 %v31
  %v95 = vunpack.c.l.b16 %v32
  %v96 = vunpack.c.l.b16 %v33
  %v97 = vpack.c.b16 %v94, %v93
  %v98 = vpack.c.b16 %v96, %v95
  %v103 = vunpack.c.l.b16 %v78
  %v104 = vunpack.c.l.b16 %v79
  %v105 = vunpack.c.l.b16 %v80
  %v106 = vunpack.c.l.b16 %v81
  %v107 = vpack.c.b16 %v104, %v103
  %v108 = vpack.c.b16 %v106, %v105
  %vm111 = vcmask 261120
  %v113 = vsel %vm111, %v97, 0
  %v116 = vsel %vm111, %v98, 0
  %118 = vmatprep.subr.bf16.mxu0 0
  %119 = vmatpush1.bf16.msra.mxu0 %v107
  %120 = vmatprep.subr.bf16.mxu0 0
  %121 = vmatpush1.bf16.msra.mxu0 %v108
  %122 = vmatprep.subr.bf16.mxu0 0
  %123 = vmatpush1.bf16.msra.mxu0 0
  %124 = vmatprep.subr.bf16.mxu0 0
  %125 = vmatpush1.bf16.msra.mxu0 0
  %126 = vmatprep.subr.bf16.mxu0 0
  %127 = vmatpush1.bf16.msra.mxu0 0
  %128 = vmatprep.subr.bf16.mxu0 0
  %129 = vmatpush1.bf16.msra.mxu0 0
  %130 = vmatprep.subr.bf16.mxu0 0
  %131 = vmatpush1.bf16.msra.mxu0 0
  %132 = vmatprep.subr.bf16.mxu0 0
  %133 = vmatpush1.bf16.msra.mxu0 0
  %134 = vmatprep.subr.bf16.mxu0 0
  %135 = vmatpush1.bf16.msra.mxu0 0
  %136 = vmatprep.subr.bf16.mxu0 0
  %137 = vmatpush1.bf16.msra.mxu0 0
  %138 = vmatprep.subr.bf16.mxu0 0
  %139 = vmatpush1.bf16.msra.mxu0 0
  %140 = vmatprep.subr.bf16.mxu0 0
  %141 = vmatpush1.bf16.msra.mxu0 0
  %142 = vmatprep.subr.bf16.mxu0 0
  %143 = vmatpush1.bf16.msra.mxu0 0
  %144 = vmatprep.subr.bf16.mxu0 0
  %145 = vmatpush1.bf16.msra.mxu0 0
  %146 = vmatprep.subr.bf16.mxu0 0
  %147 = vmatpush1.bf16.msra.mxu0 0
  %148 = vmatprep.subr.bf16.mxu0 0
  %149 = vmatpush1.bf16.msra.mxu0 0
  %150 = vmatprep.mubr.bf16.mxu0 0
  %151 = vmatmul.mubr.bf16.gmra.mrb[0].mxu0 %v113
  %v152 = vpop.f32.mrb[0].mxu0
  %v153 = vadd.f32 %v87, %v152
  %v154 = vpop.f32.mrb[0].mxu0
  %v155 = vpop.f32.mrb[0].mxu0
  %v156 = vadd.f32 %v87, %v155
  %v157 = vpop.f32.mrb[0].mxu0
  %158 = vmatprep.mubr.bf16.mxu0 0
  %159 = vmatmul.mubr.bf16.gmra.mrb[0].mxu0 %v116
  %v160 = vpop.f32.mrb[0].mxu0
  %v161 = vadd.f32 %v87, %v160
  %v162 = vpop.f32.mrb[0].mxu0
  %v163 = vpop.f32.mrb[0].mxu0
  %v164 = vadd.f32 %v87, %v163
  %v165 = vpop.f32.mrb[0].mxu0
  %166 = vdwg.mxu0
  %v167 = vmax.f32 %v153, 0.0
  %v168 = vmax.f32 %v156, 0.0
  %v169 = vmax.f32 %v161, 0.0
  %v170 = vmax.f32 %v164, 0.0
  %v171 = vpack.c.bf16 %v168, %v167
  %v172 = vpack.c.bf16 %v170, %v169
  %v173 = vld [vmem:[%s4] sm:$0xf]
  %v174 = vld [vmem:[%s4 + $0x4] sm:$0xf]
  %v175 = vld [vmem:[%s4 + $0x8] sm:$0xf]
  %v176 = vld [vmem:[%s4 + $0xc] sm:$0xf]
  %v177 = vld [vmem:[%s5] sm:$0x1]
  %v179 = vlaneseq
  %v180 = vshrl.u32 %v179, 7
  %v181 = vsub.s32 0, %v180
  %v182 = vrot.slane %v177, %v181
  %186 = vrot.lane.b32.xlu0 %v171, 112
  %v187 = vpop.permute.xlu0 %186
  %188 = vrot.lane.b32.xlu0 %v172, 112
  %v189 = vpop.permute.xlu0 %188
  %v194 = vunpack.c.l.b16 %v173
  %v195 = vunpack.c.l.b16 %v174
  %v196 = vunpack.c.l.b16 %v175
  %v197 = vunpack.c.l.b16 %v176
  %v198 = vpack.c.b16 %v195, %v194
  %v199 = vpack.c.b16 %v197, %v196
  %v203 = vsel %vm111, %v187, 0
  %v206 = vsel %vm111, %v189, 0
  %208 = vmatprep.subr.bf16.mxu0 0
  %209 = vmatpush1.bf16.msra.mxu0 %v198
  %210 = vmatprep.subr.bf16.mxu0 0
  %211 = vmatpush1.bf16.msra.mxu0 %v199
  %212 = vmatprep.subr.bf16.mxu0 0
  %213 = vmatpush1.bf16.msra.mxu0 0
  %214 = vmatprep.subr.bf16.mxu0 0
  %215 = vmatpush1.bf16.msra.mxu0 0
  %216 = vmatprep.subr.bf16.mxu0 0
  %217 = vmatpush1.bf16.msra.mxu0 0
  %218 = vmatprep.subr.bf16.mxu0 0
  %219 = vmatpush1.bf16.msra.mxu0 0
  %220 = vmatprep.subr.bf16.mxu0 0
  %221 = vmatpush1.bf16.msra.mxu0 0
  %222 = vmatprep.subr.bf16.mxu0 0
  %223 = vmatpush1.bf16.msra.mxu0 0
  %224 = vmatprep.subr.bf16.mxu0 0
  %225 = vmatpush1.bf16.msra.mxu0 0
  %226 = vmatprep.subr.bf16.mxu0 0
  %227 = vmatpush1.bf16.msra.mxu0 0
  %228 = vmatprep.subr.bf16.mxu0 0
  %229 = vmatpush1.bf16.msra.mxu0 0
  %230 = vmatprep.subr.bf16.mxu0 0
  %231 = vmatpush1.bf16.msra.mxu0 0
  %232 = vmatprep.subr.bf16.mxu0 0
  %233 = vmatpush1.bf16.msra.mxu0 0
  %234 = vmatprep.subr.bf16.mxu0 0
  %235 = vmatpush1.bf16.msra.mxu0 0
  %236 = vmatprep.subr.bf16.mxu0 0
  %237 = vmatpush1.bf16.msra.mxu0 0
  %238 = vmatprep.subr.bf16.mxu0 0
  %239 = vmatpush1.bf16.msra.mxu0 0
  %240 = vmatprep.mubr.bf16.mxu0 0
  %241 = vmatmul.mubr.bf16.gmra.mrb[0].mxu0 %v203
  %v242 = vpop.f32.mrb[0].mxu0
  %v243 = vadd.f32 %v182, %v242
  %v244 = vpop.f32.mrb[0].mxu0
  %v245 = vpop.f32.mrb[0].mxu0
  %v246 = vadd.f32 %v182, %v245
  %v247 = vpop.f32.mrb[0].mxu0
  %248 = vmatprep.mubr.bf16.mxu0 0
  %249 = vmatmul.mubr.bf16.gmra.mrb[0].mxu0 %v206
  %v250 = vpop.f32.mrb[0].mxu0
  %v251 = vadd.f32 %v182, %v250
  %v252 = vpop.f32.mrb[0].mxu0
  %v253 = vpop.f32.mrb[0].mxu0
  %v254 = vadd.f32 %v182, %v253
  %v255 = vpop.f32.mrb[0].mxu0
  %256 = vdwg.mxu0
  %v257 = vmax.f32 %v243, 0.0
  %v258 = vmax.f32 %v246, 0.0
  %v259 = vmax.f32 %v251, 0.0
  %v260 = vmax.f32 %v254, 0.0
  %v261 = vpack.c.bf16 %v258, %v257
  %v262 = vpack.c.bf16 %v260, %v259
  %v263 = vld [vmem:[%s6] sm:$0xf]
  %v264 = vld [vmem:[%s6 + $0x4] sm:$0xf]
  %v265 = vld [vmem:[%s6 + $0x8] sm:$0xf]
  %v266 = vld [vmem:[%s6 + $0xc] sm:$0xf]
  %v267 = vld [vmem:[%s7] sm:$0x1]
  %v269 = vlaneseq
  %v270 = vshrl.u32 %v269, 7
  %v271 = vsub.s32 0, %v270
  %v272 = vrot.slane %v267, %v271
  %v278 = vunpack.c.l.b16 %v263
  %v279 = vunpack.c.l.b16 %v264
  %v280 = vunpack.c.l.b16 %v265
  %v281 = vunpack.c.l.b16 %v266
  %v282 = vpack.c.b16 %v279, %v278
  %v283 = vpack.c.b16 %v281, %v280
  %v287 = vsel %vm111, %v261, 0
  %v290 = vsel %vm111, %v262, 0
  %292 = vmatprep.subr.bf16.mxu0 0
  %293 = vmatpush1.bf16.msra.mxu0 %v282
  %294 = vmatprep.subr.bf16.mxu0 0
  %295 = vmatpush1.bf16.msra.mxu0 %v283
  %296 = vmatprep.subr.bf16.mxu0 0
  %297 = vmatpush1.bf16.msra.mxu0 0
  %298 = vmatprep.subr.bf16.mxu0 0
  %299 = vmatpush1.bf16.msra.mxu0 0
  %300 = vmatprep.subr.bf16.mxu0 0
  %301 = vmatpush1.bf16.msra.mxu0 0
  %302 = vmatprep.subr.bf16.mxu0 0
  %303 = vmatpush1.bf16.msra.mxu0 0
  %304 = vmatprep.subr.bf16.mxu0 0
  %305 = vmatpush1.bf16.msra.mxu0 0
  %306 = vmatprep.subr.bf16.mxu0 0
  %307 = vmatpush1.bf16.msra.mxu0 0
  %308 = vmatprep.subr.bf16.mxu0 0
  %309 = vmatpush1.bf16.msra.mxu0 0
  %310 = vmatprep.subr.bf16.mxu0 0
  %311 = vmatpush1.bf16.msra.mxu0 0
  %312 = vmatprep.subr.bf16.mxu0 0
  %313 = vmatpush1.bf16.msra.mxu0 0
  %314 = vmatprep.subr.bf16.mxu0 0
  %315 = vmatpush1.bf16.msra.mxu0 0
  %316 = vmatprep.subr.bf16.mxu0 0
  %317 = vmatpush1.bf16.msra.mxu0 0
  %318 = vmatprep.subr.bf16.mxu0 0
  %319 = vmatpush1.bf16.msra.mxu0 0
  %320 = vmatprep.subr.bf16.mxu0 0
  %321 = vmatpush1.bf16.msra.mxu0 0
  %322 = vmatprep.subr.bf16.mxu0 0
  %323 = vmatpush1.bf16.msra.mxu0 0
  %324 = vmatprep.mubr.bf16.mxu0 0
  %325 = vmatmul.mubr.bf16.gmra.mrb[0].mxu0 %v287
  %v326 = vpop.f32.mrb[0].mxu0
  %v327 = vadd.f32 %v272, %v326
  %v328 = vpop.f32.mrb[0].mxu0
  %v329 = vpop.f32.mrb[0].mxu0
  %v330 = vadd.f32 %v272, %v329
  %v331 = vpop.f32.mrb[0].mxu0
  %332 = vmatprep.mubr.bf16.mxu0 0
  %333 = vmatmul.mubr.bf16.gmra.mrb[0].mxu0 %v290
  %v334 = vpop.f32.mrb[0].mxu0
  %v335 = vadd.f32 %v272, %v334
  %v336 = vpop.f32.mrb[0].mxu0
  %v337 = vpop.f32.mrb[0].mxu0
  %v338 = vadd.f32 %v272, %v337
  %v339 = vpop.f32.mrb[0].mxu0
  %340 = vdwg.mxu0
  %vm341 = vcmask 15360
  %v342 = vsel %vm341, %v74, 0.0
  %v343 = vsel %vm341, %v75, 0.0
  %v344 = vsel %vm341, %v76, 0.0
  %v345 = vsel %vm341, %v77, 0.0
  %v346 = vadd.f32 %v327, %v342
  %v347 = vadd.f32 %v330, %v343
  %v348 = vadd.f32 %v335, %v344
  %v349 = vadd.f32 %v338, %v345
  %v350 = vxor.u32 %v346, 2147483648
  %v351 = vxor.u32 %v347, 2147483648
  %v352 = vxor.u32 %v348, 2147483648
  %v353 = vxor.u32 %v349, 2147483648
  %v354 = vmul.f32 %v350, 1.442695
  %v355 = vpow.pop %v354
  %v356 = vmul.f32 %v351, 1.442695
  %v357 = vpow.pop %v356
  %v358 = vmul.f32 %v352, 1.442695
  %v359 = vpow.pop %v358
  %v360 = vmul.f32 %v353, 1.442695
  %v361 = vpow.pop %v360
  %v362 = vadd.f32 %v355, 1.0
  %v363 = vadd.f32 %v357, 1.0
  %v364 = vadd.f32 %v359, 1.0
  %v365 = vadd.f32 %v361, 1.0
  %v366 = vrcp.pop %v362
  %v367 = vmul.f32 1.0, %v366
  %v368 = vrcp.pop %v363
  %v369 = vmul.f32 1.0, %v368
  %v370 = vrcp.pop %v364
  %v371 = vmul.f32 1.0, %v370
  %v372 = vrcp.pop %v365
  %v373 = vmul.f32 1.0, %v372
  %378 = vrot.lane.b32.xlu0 %v367, 16
  %v379 = vpop.permute.xlu0 %378
  %380 = vrot.lane.b32.xlu0 %v369, 16
  %v381 = vpop.permute.xlu0 %380
  %382 = vrot.lane.b32.xlu0 %v371, 16
  %v383 = vpop.permute.xlu0 %382
  %384 = vrot.lane.b32.xlu0 %v373, 16
  %v385 = vpop.permute.xlu0 %384
  %vm390 = vcmask 130048
  %v391 = vsel %vm390, %v153, %v379
  %v392 = vsel %vm390, %v156, %v381
  %v393 = vsel %vm390, %v161, %v383
  %v394 = vsel %vm390, %v164, %v385
  %vm395 = vcmask 162816
  %v396 = vsel %vm395, %v391, 0.0
  %v397 = vsel %vm395, %v392, 0.0
  %v398 = vsel %vm395, %v393, 0.0
  %v399 = vsel %vm395, %v394, 0.0
  %400 = vst [vmem:[%s8] sm:$0xff] %v396
  %401 = vst [vmem:[%s8 + $0x8] sm:$0xff] %v397
  %402 = vst [vmem:[%s8 + $0x10] sm:$0xff] %v398
  %403 = vst [vmem:[%s8 + $0x18] sm:$0xff] %v399
  // Predicated region
  $region34: #{deformable_detr_forward.3} parent=0 // pred_check
    _
  $region35: #{deformable_detr_forward.3} parent=0 // pred_check_branch
    %405 = sbr.rel (0) target = $region37
  $region36: #{deformable_detr_forward.3} parent=0 // pred_region
    _
  $region37: #{deformable_detr_forward.3} parent=0 // pred_fallthru
    _
  // Predicated region
  $region38: #{deformable_detr_forward.3} parent=0 // pred_check
    _
  $region39: #{deformable_detr_forward.3} parent=0 // pred_check_branch
    %407 = sbr.rel (0) target = $region41
  $region40: #{deformable_detr_forward.3} parent=0 // pred_region
    _
  $region41: #{deformable_detr_forward.3} parent=0 // pred_fallthru
    _

</llo_original>
